<compile_context>
chip_gen: v5e
topology: v5e:2x2
jax: 0.10.0
libtpu: 0.0.40
codegen_flags: <defaults>
</compile_context>

<pallas_src>
import jax
import jax.numpy as jnp
from jax.experimental import pallas as pl
from jax.experimental.pallas import tpu as pltpu


def _round_up(n, m):
    return ((n + m - 1) // m) * m


def _vmem_budget_bytes():
    """~80% of physical VMEM (defaults of 16/32 MiB scoped are far too small)."""
    try:
        cap = int(pltpu.get_tpu_info().vmem_capacity_bytes)
    except Exception:
        cap = 64 * 1024 * 1024  # conservative fallback (v7x per-TC VMEM)
    return int(cap * 0.8)


def _auto_block_rows(in_pad, hid_pad, lat_pad, vmem_budget):
    """Largest multiple-of-8 batch tile that fits the VMEM budget (capped at 1024)."""
    # Resident, single-buffered weights / biases.
    weight_bytes = (in_pad * hid_pad * 2 + hid_pad * 4
                    + hid_pad * 2 * lat_pad * 2 + 2 * lat_pad * 4)
    # Per batch row: double-buffered x (bf16) + eps (f32) + out (f32) tiles, plus the
    # f32 h / mlv / z intermediates.
    per_row = (2 * (in_pad * 2 + lat_pad * 4 + 3 * lat_pad * 4)
               + hid_pad * 4 + 2 * lat_pad * 4 + lat_pad * 4)
    avail = vmem_budget - weight_bytes - (4 << 20)  # headroom for compiler scratch
    # TODO(synk): if the padded W1 alone exceeds the budget (huge encoders on v7x),
    # add a K grid axis over in_pad with an f32 accumulator instead of shrinking tm.
    rows = max(8, avail // max(per_row, 1))
    return int(max(8, min(1024, (rows // 8) * 8)))


def encoder_kernel(x_ref, w1_ref, b1_ref, wlv_ref, blv_ref, eps_ref, out_ref):
    lat = eps_ref.shape[-1]  # padded latent width (multiple of 128)

    # h = relu(x @ W1 + b1): bf16 MXU operands (x already bf16), f32 accumulation.
    h = jnp.dot(x_ref[...], w1_ref[...], preferred_element_type=jnp.float32) + b1_ref[...]
    h = jnp.maximum(h, 0.0)

    # Fused latent projection: one dot gives [mu | log_var] of shape (tm, 2*lat).
    mlv = jnp.dot(h.astype(jnp.bfloat16), wlv_ref[...],
                  preferred_element_type=jnp.float32) + blv_ref[...]
    mu = mlv[:, :lat]          # lane-aligned slice (lat % 128 == 0)
    log_var = mlv[:, lat:]

    # Reparameterization: z = mu + exp(log_var / 2) * eps  (f32 VPU/EUP epilogue).
    z = mu + jnp.exp(log_var * 0.5) * eps_ref[...]

    # Single lane-dense output slab [mu | log_var | z]; both stores at 128-aligned
    # lane offsets -> unmasked vst.
    out_ref[:, : 2 * lat] = mlv
    out_ref[:, 2 * lat:] = z


def encoder_forward(x, params, eps, *, block_rows=None):
    """x: (B, input_dim) f32, eps: (B, latent_dim) f32 -> (mu, log_var, z) f32."""
    w1, b1, wlv, blv = params["w1"], params["b1"], params["wlv"], params["blv"]
    L = params["latent_dim"]
    in_dim = params["input_dim"]
    in_pad, hid_pad = w1.shape
    lat2 = wlv.shape[1]
    Lp = lat2 // 2
    B = x.shape[0]

    budget = _vmem_budget_bytes()
    tm = _auto_block_rows(in_pad, hid_pad, Lp, budget)
    if block_rows is not None:
        tm = min(tm, block_rows)
    tm = max(8, min((tm // 8) * 8, _round_up(B, 8)))
    B_pad = _round_up(B, tm)

    # Wrapper-side pad + bf16 cast: x travels HBM->VMEM at half the bytes.
    x_p = jnp.pad(x, ((0, B_pad - B), (0, in_pad - in_dim))).astype(jnp.bfloat16)
    # TODO(synk): eps could be generated in-kernel with pltpu.prng_seed/prng_random_bits
    # (drops one DMA stream); kept as an input so the reference check stays exact.
    eps_p = jnp.pad(eps, ((0, B_pad - B), (0, Lp - L)))

    grid = (B_pad // tm,)

    def _run(single_buffer_weights):
        def wspec(shape):
            if single_buffer_weights:
                return pl.BlockSpec(shape, lambda i: (0, 0),
                                    pipeline_mode=pl.Buffered(1))
            return pl.BlockSpec(shape, lambda i: (0, 0))

        return pl.pallas_call(
            encoder_kernel,
            out_shape=jax.ShapeDtypeStruct((B_pad, 3 * Lp), jnp.float32),
            grid=grid,
            in_specs=[
                pl.BlockSpec((tm, in_pad), lambda i: (i, 0)),  # x (bf16), batch-tiled
                wspec((in_pad, hid_pad)),                      # W1, VMEM-resident
                wspec((1, hid_pad)),                           # b1
                wspec((hid_pad, lat2)),                        # fused [Wmu | Wvar]
                wspec((1, lat2)),                              # fused [bmu | bvar]
                pl.BlockSpec((tm, Lp), lambda i: (i, 0)),      # eps, batch-tiled
            ],
            out_specs=pl.BlockSpec((tm, 3 * Lp), lambda i: (i, 0)),
            compiler_params=pltpu.CompilerParams(
                dimension_semantics=("parallel",),   # megacore shard on v7x
                vmem_limit_bytes=int(budget),
            ),
        )(x_p, w1, b1, wlv, blv, eps_p)

    try:
        out = _run(True)
    except Exception:
        # Installed jax rejected pipeline_mode=pl.Buffered(1); use default buffering.
        out = _run(False)

    return out[:B, :L], out[:B, Lp:Lp + L], out[:B, 2 * Lp:2 * Lp + L]


def init_params(key, input_dim, hidden_dim, latent_dim):
    """nn.Linear-style uniform(-1/sqrt(fan_in)) init, fused + padded + bf16-packed.

    Weights are applied in bf16 (f32 accumulation), so results deviate from a pure
    f32 PyTorch reference at ~1e-2 level — intentional MXU-native quantization.
    """
    ks = jax.random.split(key, 6)

    def linear(kw, kb, fan_in, fan_out):
        bound = 1.0 / float(fan_in) ** 0.5
        w = jax.random.uniform(kw, (fan_in, fan_out), jnp.float32, -bound, bound)
        b = jax.random.uniform(kb, (1, fan_out), jnp.float32, -bound, bound)
        return w, b

    w1, b1 = linear(ks[0], ks[1], input_dim, hidden_dim)
    wmu, bmu = linear(ks[2], ks[3], hidden_dim, latent_dim)
    wv, bv = linear(ks[4], ks[5], hidden_dim, latent_dim)

    # One-time padding: in/hidden to 256 (MXU), latent to 128 (lane alignment).
    in_pad = _round_up(input_dim, 256)
    hid_pad = _round_up(hidden_dim, 256)
    Lp = _round_up(latent_dim, 128)

    w1_p = jnp.zeros((in_pad, hid_pad), jnp.float32).at[:input_dim, :hidden_dim].set(w1)
    b1_p = jnp.zeros((1, hid_pad), jnp.float32).at[:, :hidden_dim].set(b1)
    wlv_p = (jnp.zeros((hid_pad, 2 * Lp), jnp.float32)
             .at[:hidden_dim, :latent_dim].set(wmu)
             .at[:hidden_dim, Lp:Lp + latent_dim].set(wv))
    blv_p = (jnp.zeros((1, 2 * Lp), jnp.float32)
             .at[:, :latent_dim].set(bmu)
             .at[:, Lp:Lp + latent_dim].set(bv))

    return {
        "w1": w1_p.astype(jnp.bfloat16), "b1": b1_p,
        "wlv": wlv_p.astype(jnp.bfloat16), "blv": blv_p,
        "input_dim": input_dim, "latent_dim": latent_dim,
    }


if __name__ == "__main__":
    B, INPUT_DIM, HIDDEN_DIM, LATENT_DIM = 64, 32, 64, 16

    key = jax.random.PRNGKey(0)
    k_x, k_p, k_eps = jax.random.split(key, 3)

    x = jax.random.normal(k_x, (B, INPUT_DIM), jnp.float32)
    params = init_params(k_p, INPUT_DIM, HIDDEN_DIM, LATENT_DIM)
    eps = jax.random.normal(k_eps, (B, LATENT_DIM), jnp.float32)

    # block_rows=32 -> 2-step batch grid, exercising the pipelined / parallel path.
    mu, log_var, z = encoder_forward(x, params, eps, block_rows=32)
    jax.block_until_ready((mu, log_var, z))

    # Pure-JAX reference of the same math (same padded bf16 weights, f32 accumulation).
    w1, b1, wlv, blv = params["w1"], params["b1"], params["wlv"], params["blv"]
    in_pad = w1.shape[0]
    Lp = wlv.shape[1] // 2
    x_ref = jnp.pad(x, ((0, 0), (0, in_pad - INPUT_DIM))).astype(jnp.bfloat16)
    h_ref = jnp.maximum(
        jnp.dot(x_ref, w1, preferred_element_type=jnp.float32) + b1, 0.0)
    mlv_ref = jnp.dot(h_ref.astype(jnp.bfloat16), wlv,
                      preferred_element_type=jnp.float32) + blv
    mu_ref = mlv_ref[:, :LATENT_DIM]
    lv_ref = mlv_ref[:, Lp:Lp + LATENT_DIM]
    z_ref = mu_ref + jnp.exp(lv_ref * 0.5) * eps

    assert jnp.allclose(mu, mu_ref, atol=1e-2, rtol=1e-2)
    assert jnp.allclose(log_var, lv_ref, atol=1e-2, rtol=1e-2)
    assert jnp.allclose(z, z_ref, atol=1e-2, rtol=1e-2)

    print("KERNEL_OK")
</pallas_src>

<mosaic_0001>
module attributes {stable_mosaic.version = 11 : i64} {
  func.func @encoder_kernel(%arg0: i32, %arg1: memref<32x256xbf16, #tpu.memory_space<vmem>>, %arg2: memref<256x256xbf16, #tpu.memory_space<vmem>>, %arg3: memref<1x256xf32, #tpu.memory_space<vmem>>, %arg4: memref<256x256xbf16, #tpu.memory_space<vmem>>, %arg5: memref<1x256xf32, #tpu.memory_space<vmem>>, %arg6: memref<32x128xf32, #tpu.memory_space<vmem>>, %arg7: memref<32x384xf32, #tpu.memory_space<vmem>>) attributes {dimension_semantics = [#tpu.dimension_semantics<parallel>], iteration_bounds = array<i64: 2>, scalar_prefetch = 0 : i64, scratch_operands = 0 : i64, tpu.core_type = #tpu.core_type<tc>, window_params = [{transform_indices = @transform_0, window_bounds = array<i64: 32, 256>}, {pipeline_mode = #tpu.pipeline_mode<synchronous>, transform_indices = @transform_1, window_bounds = array<i64: 256, 256>}, {pipeline_mode = #tpu.pipeline_mode<synchronous>, transform_indices = @transform_2, window_bounds = array<i64: 1, 256>}, {pipeline_mode = #tpu.pipeline_mode<synchronous>, transform_indices = @transform_3, window_bounds = array<i64: 256, 256>}, {pipeline_mode = #tpu.pipeline_mode<synchronous>, transform_indices = @transform_4, window_bounds = array<i64: 1, 256>}, {transform_indices = @transform_5, window_bounds = array<i64: 32, 128>}, {transform_indices = @transform_6, window_bounds = array<i64: 32, 384>}]} {
    %c0 = arith.constant 0 : index
    %c0_0 = arith.constant 0 : index
    %0 = vector.load %arg1[%c0, %c0_0] : memref<32x256xbf16, #tpu.memory_space<vmem>>, vector<32x256xbf16>
    %c0_1 = arith.constant 0 : index
    %c0_2 = arith.constant 0 : index
    %1 = vector.load %arg2[%c0_1, %c0_2] : memref<256x256xbf16, #tpu.memory_space<vmem>>, vector<256x256xbf16>
    %cst = arith.constant dense<0.000000e+00> : vector<32x256xf32>
    %2 = tpu.matmul %0, %1, %cst {dimension_numbers = #tpu.dot_dimension_numbers<[1], [0], [0], [1], [0, 0, 1, 1], [], []>} : vector<32x256xbf16>, vector<256x256xbf16>, vector<32x256xf32> -> vector<32x256xf32>
    %c0_3 = arith.constant 0 : index
    %c0_4 = arith.constant 0 : index
    %3 = vector.load %arg3[%c0_3, %c0_4] : memref<1x256xf32, #tpu.memory_space<vmem>>, vector<1x256xf32>
    %4 = vector.broadcast %3 : vector<1x256xf32> to vector<32x256xf32>
    %5 = arith.addf %2, %4 : vector<32x256xf32>
    %cst_5 = arith.constant 0.000000e+00 : f32
    %6 = vector.broadcast %cst_5 : f32 to vector<32x256xf32>
    %7 = arith.maximumf %5, %6 : vector<32x256xf32>
    %8 = arith.truncf %7 : vector<32x256xf32> to vector<32x256xbf16>
    %c0_6 = arith.constant 0 : index
    %c0_7 = arith.constant 0 : index
    %9 = vector.load %arg4[%c0_6, %c0_7] : memref<256x256xbf16, #tpu.memory_space<vmem>>, vector<256x256xbf16>
    %cst_8 = arith.constant dense<0.000000e+00> : vector<32x256xf32>
    %10 = tpu.matmul %8, %9, %cst_8 {dimension_numbers = #tpu.dot_dimension_numbers<[1], [0], [0], [1], [0, 0, 1, 1], [], []>} : vector<32x256xbf16>, vector<256x256xbf16>, vector<32x256xf32> -> vector<32x256xf32>
    %c0_9 = arith.constant 0 : index
    %c0_10 = arith.constant 0 : index
    %11 = vector.load %arg5[%c0_9, %c0_10] : memref<1x256xf32, #tpu.memory_space<vmem>>, vector<1x256xf32>
    %12 = vector.broadcast %11 : vector<1x256xf32> to vector<32x256xf32>
    %13 = arith.addf %10, %12 : vector<32x256xf32>
    %14 = vector.extract_strided_slice %13 {offsets = [0, 0], sizes = [32, 128], strides = [1, 1]} : vector<32x256xf32> to vector<32x128xf32>
    %15 = vector.extract_strided_slice %13 {offsets = [0, 128], sizes = [32, 128], strides = [1, 1]} : vector<32x256xf32> to vector<32x128xf32>
    %cst_11 = arith.constant 5.000000e-01 : f32
    %16 = vector.broadcast %cst_11 : f32 to vector<32x128xf32>
    %17 = arith.mulf %15, %16 : vector<32x128xf32>
    %18 = math.exp %17 : vector<32x128xf32>
    %c0_12 = arith.constant 0 : index
    %c0_13 = arith.constant 0 : index
    %19 = vector.load %arg6[%c0_12, %c0_13] : memref<32x128xf32, #tpu.memory_space<vmem>>, vector<32x128xf32>
    %20 = arith.mulf %18, %19 : vector<32x128xf32>
    %21 = arith.addf %14, %20 : vector<32x128xf32>
    %c0_14 = arith.constant 0 : index
    %c0_15 = arith.constant 0 : index
    %22 = vector.load %arg7[%c0_14, %c0_15] : memref<32x384xf32, #tpu.memory_space<vmem>>, vector<32x256xf32>
    tpu.vector_store %arg7[%c0_14, %c0_15], %13 {strides = array<i32>} : memref<32x384xf32, #tpu.memory_space<vmem>>, vector<32x256xf32>,
    %c0_16 = arith.constant 0 : index
    %c256 = arith.constant 256 : index
    %23 = vector.load %arg7[%c0_16, %c256] : memref<32x384xf32, #tpu.memory_space<vmem>>, vector<32x128xf32>
    tpu.vector_store %arg7[%c0_16, %c256], %21 {strides = array<i32>} : memref<32x384xf32, #tpu.memory_space<vmem>>, vector<32x128xf32>,
    return
  }
  func.func @transform_0(%arg0: i32) -> (i32, i32) {
    %c0_i32 = arith.constant 0 : i32
    %c0_i32_0 = arith.constant 0 : i32
    return %arg0, %c0_i32 : i32, i32
  }
  func.func @transform_1(%arg0: i32) -> (i32, i32) {
    %c0_i32 = arith.constant 0 : i32
    %c0_i32_0 = arith.constant 0 : i32
    %c0_i32_1 = arith.constant 0 : i32
    return %c0_i32, %c0_i32_0 : i32, i32
  }
  func.func @transform_2(%arg0: i32) -> (i32, i32) {
    %c0_i32 = arith.constant 0 : i32
    %c0_i32_0 = arith.constant 0 : i32
    %c0_i32_1 = arith.constant 0 : i32
    return %c0_i32, %c0_i32_0 : i32, i32
  }
  func.func @transform_3(%arg0: i32) -> (i32, i32) {
    %c0_i32 = arith.constant 0 : i32
    %c0_i32_0 = arith.constant 0 : i32
    %c0_i32_1 = arith.constant 0 : i32
    return %c0_i32, %c0_i32_0 : i32, i32
  }
  func.func @transform_4(%arg0: i32) -> (i32, i32) {
    %c0_i32 = arith.constant 0 : i32
    %c0_i32_0 = arith.constant 0 : i32
    %c0_i32_1 = arith.constant 0 : i32
    return %c0_i32, %c0_i32_0 : i32, i32
  }
  func.func @transform_5(%arg0: i32) -> (i32, i32) {
    %c0_i32 = arith.constant 0 : i32
    %c0_i32_0 = arith.constant 0 : i32
    return %arg0, %c0_i32 : i32, i32
  }
  func.func @transform_6(%arg0: i32) -> (i32, i32) {
    %c0_i32 = arith.constant 0 : i32
    %c0_i32_0 = arith.constant 0 : i32
    return %arg0, %c0_i32 : i32, i32
  }
}

module attributes {stable_mosaic.version = 11 : i64} {
  func.func @encoder_kernel(%arg0: i32, %arg1: memref<32x256xbf16, #tpu.memory_space<vmem>>, %arg2: memref<256x256xbf16, #tpu.memory_space<vmem>>, %arg3: memref<1x256xf32, #tpu.memory_space<vmem>>, %arg4: memref<256x256xbf16, #tpu.memory_space<vmem>>, %arg5: memref<1x256xf32, #tpu.memory_space<vmem>>, %arg6: memref<32x128xf32, #tpu.memory_space<vmem>>, %arg7: memref<32x384xf32, #tpu.memory_space<vmem>>) attributes {dimension_semantics = [#tpu.dimension_semantics<parallel>], iteration_bounds = array<i64: 2>, scalar_prefetch = 0 : i64, scratch_operands = 0 : i64, tpu.core_type = #tpu.core_type<tc>, window_params = [{transform_indices = @transform_0, window_bounds = array<i64: 32, 256>}, {pipeline_mode = #tpu.pipeline_mode<synchronous>, transform_indices = @transform_1, window_bounds = array<i64: 256, 256>}, {pipeline_mode = #tpu.pipeline_mode<synchronous>, transform_indices = @transform_2, window_bounds = array<i64: 1, 256>}, {pipeline_mode = #tpu.pipeline_mode<synchronous>, transform_indices = @transform_3, window_bounds = array<i64: 256, 256>}, {pipeline_mode = #tpu.pipeline_mode<synchronous>, transform_indices = @transform_4, window_bounds = array<i64: 1, 256>}, {transform_indices = @transform_5, window_bounds = array<i64: 32, 128>}, {transform_indices = @transform_6, window_bounds = array<i64: 32, 384>}]} {
    %c0 = arith.constant 0 : index
    %c0_0 = arith.constant 0 : index
    %0 = vector.load %arg1[%c0, %c0_0] : memref<32x256xbf16, #tpu.memory_space<vmem>>, vector<32x256xbf16>
    %c0_1 = arith.constant 0 : index
    %c0_2 = arith.constant 0 : index
    %1 = vector.load %arg2[%c0_1, %c0_2] : memref<256x256xbf16, #tpu.memory_space<vmem>>, vector<256x256xbf16>
    %cst = arith.constant dense<0.000000e+00> : vector<32x256xf32>
    %2 = tpu.matmul %0, %1, %cst {dimension_numbers = #tpu.dot_dimension_numbers<[1], [0], [0], [1], [0, 0, 1, 1], [], []>} : vector<32x256xbf16>, vector<256x256xbf16>, vector<32x256xf32> -> vector<32x256xf32>
    %c0_3 = arith.constant 0 : index
    %c0_4 = arith.constant 0 : index
    %3 = vector.load %arg3[%c0_3, %c0_4] : memref<1x256xf32, #tpu.memory_space<vmem>>, vector<1x256xf32>
    %4 = vector.broadcast %3 : vector<1x256xf32> to vector<32x256xf32>
    %5 = arith.addf %2, %4 : vector<32x256xf32>
    %cst_5 = arith.constant 0.000000e+00 : f32
    %6 = vector.broadcast %cst_5 : f32 to vector<32x256xf32>
    %7 = arith.maximumf %5, %6 : vector<32x256xf32>
    %8 = arith.truncf %7 : vector<32x256xf32> to vector<32x256xbf16>
    %c0_6 = arith.constant 0 : index
    %c0_7 = arith.constant 0 : index
    %9 = vector.load %arg4[%c0_6, %c0_7] : memref<256x256xbf16, #tpu.memory_space<vmem>>, vector<256x256xbf16>
    %cst_8 = arith.constant dense<0.000000e+00> : vector<32x256xf32>
    %10 = tpu.matmul %8, %9, %cst_8 {dimension_numbers = #tpu.dot_dimension_numbers<[1], [0], [0], [1], [0, 0, 1, 1], [], []>} : vector<32x256xbf16>, vector<256x256xbf16>, vector<32x256xf32> -> vector<32x256xf32>
    %c0_9 = arith.constant 0 : index
    %c0_10 = arith.constant 0 : index
    %11 = vector.load %arg5[%c0_9, %c0_10] : memref<1x256xf32, #tpu.memory_space<vmem>>, vector<1x256xf32>
    %12 = vector.broadcast %11 : vector<1x256xf32> to vector<32x256xf32>
    %13 = arith.addf %10, %12 : vector<32x256xf32>
    %14 = vector.extract_strided_slice %13 {offsets = [0, 0], sizes = [32, 128], strides = [1, 1]} : vector<32x256xf32> to vector<32x128xf32>
    %15 = vector.extract_strided_slice %13 {offsets = [0, 128], sizes = [32, 128], strides = [1, 1]} : vector<32x256xf32> to vector<32x128xf32>
    %cst_11 = arith.constant 5.000000e-01 : f32
    %16 = vector.broadcast %cst_11 : f32 to vector<32x128xf32>
    %17 = arith.mulf %15, %16 : vector<32x128xf32>
    %18 = math.exp %17 : vector<32x128xf32>
    %c0_12 = arith.constant 0 : index
    %c0_13 = arith.constant 0 : index
    %19 = vector.load %arg6[%c0_12, %c0_13] : memref<32x128xf32, #tpu.memory_space<vmem>>, vector<32x128xf32>
    %20 = arith.mulf %18, %19 : vector<32x128xf32>
    %21 = arith.addf %14, %20 : vector<32x128xf32>
    %c0_14 = arith.constant 0 : index
    %c0_15 = arith.constant 0 : index
    %22 = vector.load %arg7[%c0_14, %c0_15] : memref<32x384xf32, #tpu.memory_space<vmem>>, vector<32x256xf32>
    tpu.vector_store %arg7[%c0_14, %c0_15], %13 {strides = array<i32>} : memref<32x384xf32, #tpu.memory_space<vmem>>, vector<32x256xf32>,
    %c0_16 = arith.constant 0 : index
    %c256 = arith.constant 256 : index
    %23 = vector.load %arg7[%c0_16, %c256] : memref<32x384xf32, #tpu.memory_space<vmem>>, vector<32x128xf32>
    tpu.vector_store %arg7[%c0_16, %c256], %21 {strides = array<i32>} : memref<32x384xf32, #tpu.memory_space<vmem>>, vector<32x128xf32>,
    return
  }
  func.func @transform_0(%arg0: i32) -> (i32, i32) {
    %c0_i32 = arith.constant 0 : i32
    %c0_i32_0 = arith.constant 0 : i32
    return %arg0, %c0_i32 : i32, i32
  }
  func.func @transform_1(%arg0: i32) -> (i32, i32) {
    %c0_i32 = arith.constant 0 : i32
    %c0_i32_0 = arith.constant 0 : i32
    %c0_i32_1 = arith.constant 0 : i32
    return %c0_i32, %c0_i32_0 : i32, i32
  }
  func.func @transform_2(%arg0: i32) -> (i32, i32) {
    %c0_i32 = arith.constant 0 : i32
    %c0_i32_0 = arith.constant 0 : i32
    %c0_i32_1 = arith.constant 0 : i32
    return %c0_i32, %c0_i32_0 : i32, i32
  }
  func.func @transform_3(%arg0: i32) -> (i32, i32) {
    %c0_i32 = arith.constant 0 : i32
    %c0_i32_0 = arith.constant 0 : i32
    %c0_i32_1 = arith.constant 0 : i32
    return %c0_i32, %c0_i32_0 : i32, i32
  }
  func.func @transform_4(%arg0: i32) -> (i32, i32) {
    %c0_i32 = arith.constant 0 : i32
    %c0_i32_0 = arith.constant 0 : i32
    %c0_i32_1 = arith.constant 0 : i32
    return %c0_i32, %c0_i32_0 : i32, i32
  }
  func.func @transform_5(%arg0: i32) -> (i32, i32) {
    %c0_i32 = arith.constant 0 : i32
    %c0_i32_0 = arith.constant 0 : i32
    return %arg0, %c0_i32 : i32, i32
  }
  func.func @transform_6(%arg0: i32) -> (i32, i32) {
    %c0_i32 = arith.constant 0 : i32
    %c0_i32_0 = arith.constant 0 : i32
    return %arg0, %c0_i32 : i32, i32
  }
}

</mosaic_0001>

<llo_original>
// kernel: tpu_custom_call.1
$region0: #{tpu_custom_call.1}
  #allocation0 [shape = 'u32[]', space=smem, size = 0x4, offset = 0x4, fixed_abs, tag = 'smem constant byte address 0x4 - core index']
  #allocation1 [shape = 'u32[72,128]{1,0:T(1,128)}', space=vmem, size = 0x9000, scoped, tag = 'internal scratch']
  %s0 = inlined_call_operand.hbm [shape: bf16[64,256], index: 0, kind: input, shape index: {}]
  %s1 = inlined_call_operand.hbm [shape: bf16[256,256], index: 1, kind: input, shape index: {}]
  %s2 = inlined_call_operand.hbm [shape: f32[1,256], index: 2, kind: input, shape index: {}]
  %s3 = inlined_call_operand.hbm [shape: bf16[256,256], index: 3, kind: input, shape index: {}]
  %s4 = inlined_call_operand.vmem [shape: f32[1,256], index: 4, kind: input, shape index: {}]
  %s5 = inlined_call_operand.hbm [shape: f32[64,128], index: 5, kind: input, shape index: {}]
  %s6 = inlined_call_operand.hbm [shape: f32[64,384], index: 6, kind: output, shape index: {}]
  %s7 = sld [smem:[#allocation0]]
  $region77: #{tpu_custom_call.1} parent=0
    _
  %s9 = ssub.s32 1, %s7
  %s10 = scalar_select 0, %s9, %s7
  $region1: #{tpu_custom_call.1} parent=0
    #allocation2 [shape = 'u8[32768]{0}', space=vmem, size = 0x8000, scoped, tag = 'input window, operand 0']
    #allocation3 [shape = 's32[2]{0}', space=sflag, size = 0x8, scoped, tag = 'scoped memory for tpu_custom_call.1']
    #allocation4 [shape = 's32[2]{0}', space=sflag, size = 0x8, scoped, tag = 'scoped memory for tpu_custom_call.1']
    #allocation5 [shape = 'u8[131072]{0}', space=vmem, size = 0x20000, scoped, tag = 'input window, operand 1, single buffered']
    #allocation6 [shape = 's32[1]{0}', space=sflag, size = 0x4, scoped, tag = 'scoped memory for tpu_custom_call.1']
    #allocation7 [shape = 'u8[1024]{0}', space=vmem, size = 0x400, scoped, tag = 'input window, operand 2, single buffered']
    #allocation8 [shape = 'u8[131072]{0}', space=vmem, size = 0x20000, scoped, tag = 'input window, operand 3, single buffered']
    #allocation9 [shape = 's32[1]{0}', space=sflag, size = 0x4, scoped, tag = 'scoped memory for tpu_custom_call.1']
    #allocation10 [shape = 'u8[32768]{0}', space=vmem, size = 0x8000, scoped, tag = 'input window, operand 5']
    #allocation11 [shape = 'u8[98304]{0}', space=vmem, size = 0x18000, scoped, tag = 'output window, operand 0']
    %11 = vsyncpa [#allocation3], 0
    %s12 = scalar_lea.sflag [#allocation3], 1
    %13 = vsyncpa %s12, 0
    %14 = vsyncpa [#allocation6], 0
    %15 = vsyncpa [#allocation9], 0
    %16 = vsyncpa [#allocation4], 0
    %s17 = scalar_lea.sflag [#allocation4], 1
    %18 = vsyncpa %s17, 0
    loop: start=0, step=1, limit=4
    $region2: #{tpu_custom_call.1} parent=1 // loop_pre_header
      _
    $region3: #{tpu_custom_call.1} parent=1 // loop_header
      %s20 = sphi 0, %s24
      %p21 = scmp.ge.s32.totalorder %s20, 4
      %s30 = sphi 0, %s32
      %s33 = sphi 0, %s30
      %s34 = sphi 0, %s33
      %s50 = sphi 0, %s34
      %s54 = sphi 0, %s54
      %s56 = sphi 0, %s54
      %s57 = sphi 0, %s56
      %s71 = sphi 0, %s57
      %s75 = sphi 0, %s75
      %s77 = sphi 0, %s75
      %s78 = sphi 0, %s77
      %s92 = sphi 0, %s78
      %s96 = sphi 0, %s96
      %s98 = sphi 0, %s96
      %s99 = sphi 0, %s98
      %s113 = sphi 0, %s99
      %s117 = sphi 0, %s117
      %s119 = sphi 0, %s117
      %s120 = sphi 0, %s119
      %s134 = sphi 0, %s120
      %s140 = sphi 0, %s142
      %s143 = sphi 0, %s140
      %s144 = sphi 0, %s143
      %s160 = sphi 0, %s144
      %s166 = sphi 0, %s168
      %s169 = sphi 0, %s166
      %s170 = sphi 0, %s169
      %s186 = sphi 0, %s170
    $region4: #{tpu_custom_call.1} parent=1 // loop_header_branch
      %23 = sbr.rel (%p21) target = $region8
    $region5: #{tpu_custom_call.1} parent=1 // loop_body
      %s25 = ssub.s32 %s20, 1
      %s26 = ssub.s32 %s20, 2
      %s27 = sadd.s32 %s20, 1
      %s28 = ssub.s32 %s20, %s27
      %p29 = scmp.eq.s32.totalorder %s28, 0
      %s31 = sadd.s32 %s30, 1
      %s32 = scalar_select %p29, %s30, %s31
      %p35 = pneg %p29
      %p36 = scmp.eq.s32.totalorder %s20, 1
      %p37 = por %p35, %p36
      %p38 = scmp.ne.s32.totalorder %s30, %s33
      %p39 = scmp.eq.s32.totalorder %s20, 0
      %p40 = por %p38, %p39
      %p41 = scmp.ne.s32.totalorder %s30, %s33
      %p42 = scmp.eq.s32.totalorder %s25, 1
      %p43 = por %p41, %p42
      %p44 = scmp.ne.s32.totalorder %s33, %s34
      %p45 = scmp.eq.s32.totalorder %s25, 0
      %p46 = por %p44, %p45
      %p47 = scmp.ne.s32.totalorder %s33, %s34
      %p48 = scmp.eq.s32.totalorder %s26, 1
      %p49 = por %p47, %p48
      %p51 = scmp.ne.s32.totalorder %s34, %s50
      %p52 = scmp.eq.s32.totalorder %s26, 0
      %p53 = por %p51, %p52
      %s55 = sadd.s32 %s54, 1
      %p58 = scmp.eq.s32.totalorder %s20, 1
      %p59 = scmp.ne.s32.totalorder %s54, %s56
      %p60 = scmp.eq.s32.totalorder %s20, 0
      %p61 = por %p59, %p60
      %p62 = scmp.ne.s32.totalorder %s54, %s56
      %p63 = scmp.eq.s32.totalorder %s25, 1
      %p64 = por %p62, %p63
      %p65 = scmp.ne.s32.totalorder %s56, %s57
      %p66 = scmp.eq.s32.totalorder %s25, 0
      %p67 = por %p65, %p66
      %p68 = scmp.ne.s32.totalorder %s56, %s57
      %p69 = scmp.eq.s32.totalorder %s26, 1
      %p70 = por %p68, %p69
      %p72 = scmp.ne.s32.totalorder %s57, %s71
      %p73 = scmp.eq.s32.totalorder %s26, 0
      %p74 = por %p72, %p73
      %s76 = sadd.s32 %s75, 1
      %p79 = scmp.eq.s32.totalorder %s20, 1
      %p80 = scmp.ne.s32.totalorder %s75, %s77
      %p81 = scmp.eq.s32.totalorder %s20, 0
      %p82 = por %p80, %p81
      %p83 = scmp.ne.s32.totalorder %s75, %s77
      %p84 = scmp.eq.s32.totalorder %s25, 1
      %p85 = por %p83, %p84
      %p86 = scmp.ne.s32.totalorder %s77, %s78
      %p87 = scmp.eq.s32.totalorder %s25, 0
      %p88 = por %p86, %p87
      %p89 = scmp.ne.s32.totalorder %s77, %s78
      %p90 = scmp.eq.s32.totalorder %s26, 1
      %p91 = por %p89, %p90
      %p93 = scmp.ne.s32.totalorder %s78, %s92
      %p94 = scmp.eq.s32.totalorder %s26, 0
      %p95 = por %p93, %p94
      %s97 = sadd.s32 %s96, 1
      %p100 = scmp.eq.s32.totalorder %s20, 1
      %p101 = scmp.ne.s32.totalorder %s96, %s98
      %p102 = scmp.eq.s32.totalorder %s20, 0
      %p103 = por %p101, %p102
      %p104 = scmp.ne.s32.totalorder %s96, %s98
      %p105 = scmp.eq.s32.totalorder %s25, 1
      %p106 = por %p104, %p105
      %p107 = scmp.ne.s32.totalorder %s98, %s99
      %p108 = scmp.eq.s32.totalorder %s25, 0
      %p109 = por %p107, %p108
      %p110 = scmp.ne.s32.totalorder %s98, %s99
      %p111 = scmp.eq.s32.totalorder %s26, 1
      %p112 = por %p110, %p111
      %p114 = scmp.ne.s32.totalorder %s99, %s113
      %p115 = scmp.eq.s32.totalorder %s26, 0
      %p116 = por %p114, %p115
      %s118 = sadd.s32 %s117, 1
      %p121 = scmp.eq.s32.totalorder %s20, 1
      %p122 = scmp.ne.s32.totalorder %s117, %s119
      %p123 = scmp.eq.s32.totalorder %s20, 0
      %p124 = por %p122, %p123
      %p125 = scmp.ne.s32.totalorder %s117, %s119
      %p126 = scmp.eq.s32.totalorder %s25, 1
      %p127 = por %p125, %p126
      %p128 = scmp.ne.s32.totalorder %s119, %s120
      %p129 = scmp.eq.s32.totalorder %s25, 0
      %p130 = por %p128, %p129
      %p131 = scmp.ne.s32.totalorder %s119, %s120
      %p132 = scmp.eq.s32.totalorder %s26, 1
      %p133 = por %p131, %p132
      %p135 = scmp.ne.s32.totalorder %s120, %s134
      %p136 = scmp.eq.s32.totalorder %s26, 0
      %p137 = por %p135, %p136
      %s138 = ssub.s32 %s20, %s27
      %p139 = scmp.eq.s32.totalorder %s138, 0
      %s141 = sadd.s32 %s140, 1
      %s142 = scalar_select %p139, %s140, %s141
      %p145 = pneg %p139
      %p146 = scmp.eq.s32.totalorder %s20, 1
      %p147 = por %p145, %p146
      %p148 = scmp.ne.s32.totalorder %s140, %s143
      %p149 = scmp.eq.s32.totalorder %s20, 0
      %p150 = por %p148, %p149
      %p151 = scmp.ne.s32.totalorder %s140, %s143
      %p152 = scmp.eq.s32.totalorder %s25, 1
      %p153 = por %p151, %p152
      %p154 = scmp.ne.s32.totalorder %s143, %s144
      %p155 = scmp.eq.s32.totalorder %s25, 0
      %p156 = por %p154, %p155
      %p157 = scmp.ne.s32.totalorder %s143, %s144
      %p158 = scmp.eq.s32.totalorder %s26, 1
      %p159 = por %p157, %p158
      %p161 = scmp.ne.s32.totalorder %s144, %s160
      %p162 = scmp.eq.s32.totalorder %s26, 0
      %p163 = por %p161, %p162
      %s164 = ssub.s32 %s20, %s27
      %p165 = scmp.eq.s32.totalorder %s164, 0
      %s167 = sadd.s32 %s166, 1
      %s168 = scalar_select %p165, %s166, %s167
      %p171 = pneg %p165
      %p172 = scmp.eq.s32.totalorder %s20, 1
      %p173 = por %p171, %p172
      %p174 = scmp.ne.s32.totalorder %s166, %s169
      %p175 = scmp.eq.s32.totalorder %s20, 0
      %p176 = por %p174, %p175
      %p177 = scmp.ne.s32.totalorder %s166, %s169
      %p178 = scmp.eq.s32.totalorder %s25, 1
      %p179 = por %p177, %p178
      %p180 = scmp.ne.s32.totalorder %s169, %s170
      %p181 = scmp.eq.s32.totalorder %s25, 0
      %p182 = por %p180, %p181
      %p183 = scmp.ne.s32.totalorder %s169, %s170
      %p184 = scmp.eq.s32.totalorder %s26, 1
      %p185 = por %p183, %p184
      %p187 = scmp.ne.s32.totalorder %s170, %s186
      %p188 = scmp.eq.s32.totalorder %s26, 0
      %p189 = por %p187, %p188
      %p190 = scmp.le.s32.totalorder 1, %s20
      %p191 = scmp.lt.s32.totalorder %s20, 3
      %p192 = pnand %p190, %p191
      %p193 = pneg %p192
      // Predicated region
      $region9: #{tpu_custom_call.1} parent=5 // pred_check
        _
      $region10: #{tpu_custom_call.1} parent=5 // pred_check_branch
        %195 = sbr.rel (%p192) target = $region12
      $region11: #{tpu_custom_call.1} parent=5 // pred_region
        %s196 = ssub.s32 %s20, 1
        // Predicated region
        $region13: #{tpu_custom_call.1} parent=11 // pred_check
          %p197 = pneg %p67
        $region14: #{tpu_custom_call.1} parent=11 // pred_check_branch
          %199 = sbr.rel (%p197) target = $region16
        $region15: #{tpu_custom_call.1} parent=11 // pred_region
          %201 = vsyncadd [#allocation6], 0
          %s202 = sshll.u32 %s1, 4
          %s203 = int_to_ptr.hbm [resolvable:$true] %s202
          %s204 = sshll.u32 [#allocation5], 4
          %s205 = int_to_ptr.vmem [resolvable:$true] %s204
          %210 = dma.hbm_to_vmem [thread:$0]  %s203, 4096, %s205, [#allocation6], 128, 128, 8
        $region16: #{tpu_custom_call.1} parent=11 // pred_fallthru
          _
        // Predicated region
        $region17: #{tpu_custom_call.1} parent=11 // pred_check
          %p211 = pneg %p88
        $region18: #{tpu_custom_call.1} parent=11 // pred_check_branch
          %213 = sbr.rel (%p211) target = $region20
        $region19: #{tpu_custom_call.1} parent=11 // pred_region
          %215 = vsyncadd [#allocation6], 0
          %s217 = sshll.u32 %s2, 4
          %s218 = int_to_ptr.hbm [resolvable:$true] %s217
          %s219 = sshll.u32 [#allocation7], 4
          %s220 = int_to_ptr.vmem [resolvable:$true] %s219
          %222 = dma.hbm_to_vmem [thread:$0]  %s218, 32, %s220, [#allocation6]
        $region20: #{tpu_custom_call.1} parent=11 // pred_fallthru
          _
        // Predicated region
        $region21: #{tpu_custom_call.1} parent=11 // pred_check
          %p223 = pneg %p109
        $region22: #{tpu_custom_call.1} parent=11 // pred_check_branch
          %225 = sbr.rel (%p223) target = $region24
        $region23: #{tpu_custom_call.1} parent=11 // pred_region
          %227 = vsyncadd [#allocation9], 0
          %s228 = sshll.u32 %s3, 4
          %s229 = int_to_ptr.hbm [resolvable:$true] %s228
          %s230 = sshll.u32 [#allocation8], 4
          %s231 = int_to_ptr.vmem [resolvable:$true] %s230
          %236 = dma.hbm_to_vmem [thread:$0]  %s229, 4096, %s231, [#allocation9], 128, 128, 8
        $region24: #{tpu_custom_call.1} parent=11 // pred_fallthru
          _
        // Predicated region
        $region25: #{tpu_custom_call.1} parent=11 // pred_check
          %p237 = pneg %p130
        $region26: #{tpu_custom_call.1} parent=11 // pred_check_branch
          %239 = sbr.rel (%p237) target = $region28
        $region27: #{tpu_custom_call.1} parent=11 // pred_region
          _
        $region28: #{tpu_custom_call.1} parent=11 // pred_fallthru
          _
      $region12: #{tpu_custom_call.1} parent=5 // pred_fallthru
        _
      %p240 = scmp.lt.s32.totalorder %s20, 2
      // Predicated region
      $region29: #{tpu_custom_call.1} parent=5 // pred_check
        %p241 = pneg %p240
      $region30: #{tpu_custom_call.1} parent=5 // pred_check_branch
        %243 = sbr.rel (%p241) target = $region32
      $region31: #{tpu_custom_call.1} parent=5 // pred_region
        // Predicated region
        $region33: #{tpu_custom_call.1} parent=31 // pred_check
          %p244 = pneg %p40
        $region34: #{tpu_custom_call.1} parent=31 // pred_check_branch
          %246 = sbr.rel (%p244) target = $region36
        $region35: #{tpu_custom_call.1} parent=31 // pred_region
          %s247 = sand.u32 %s20, 1
          %s248 = scalar_lea.sflag [#allocation3], %s247
          %s249 = sand.u32 %s30, 1
          %s250 = smul.addr %s249, 32
          %s251 = scalar_lea.vmem [#allocation2], %s250
          %s252 = smul.u32 4, %s20
          %254 = vsyncadd %s248, 0
          %s255 = smul.addr %s252, 2
          %s256 = smul.addr %s255, 4
          %s257 = scalar_lea.hbm %s0, %s256
          %s258 = sshll.u32 %s257, 4
          %s259 = int_to_ptr.hbm [resolvable:$true] %s258
          %s260 = sshll.u32 %s251, 4
          %s261 = int_to_ptr.vmem [resolvable:$true] %s260
          %266 = dma.hbm_to_vmem [thread:$0]  %s259, 512, %s261, %s248, 128, 128, 8
        $region36: #{tpu_custom_call.1} parent=31 // pred_fallthru
          _
        // Predicated region
        $region37: #{tpu_custom_call.1} parent=31 // pred_check
          %p267 = pneg %p150
        $region38: #{tpu_custom_call.1} parent=31 // pred_check_branch
          %269 = sbr.rel (%p267) target = $region40
        $region39: #{tpu_custom_call.1} parent=31 // pred_region
          %s270 = sand.u32 %s20, 1
          %s271 = scalar_lea.sflag [#allocation3], %s270
          %s272 = sand.u32 %s140, 1
          %s273 = smul.addr %s272, 32
          %s274 = scalar_lea.vmem [#allocation10], %s273
          %s275 = smul.u32 4, %s20
          %277 = vsyncadd %s271, 0
          %s278 = smul.addr %s275, 8
          %s279 = scalar_lea.hbm %s5, %s278
          %s280 = sshll.u32 %s279, 4
          %s281 = int_to_ptr.hbm [resolvable:$true] %s280
          %s282 = sshll.u32 %s274, 4
          %s283 = int_to_ptr.vmem [resolvable:$true] %s282
          %288 = dma.hbm_to_vmem [thread:$0]  %s281, 512, %s283, %s271, 128, 128, 8
        $region40: #{tpu_custom_call.1} parent=31 // pred_fallthru
          _
      $region32: #{tpu_custom_call.1} parent=5 // pred_fallthru
        _
      %p289 = scmp.le.s32.totalorder 1, %s20
      %p290 = scmp.lt.s32.totalorder %s20, 3
      %p291 = pnand %p289, %p290
      %p292 = pneg %p291
      // Predicated region
      $region41: #{tpu_custom_call.1} parent=5 // pred_check
        _
      $region42: #{tpu_custom_call.1} parent=5 // pred_check_branch
        %294 = sbr.rel (%p291) target = $region44
      $region43: #{tpu_custom_call.1} parent=5 // pred_region
        %s295 = ssub.s32 %s20, 1
        %s296 = sand.u32 %s25, 1
        %s297 = scalar_lea.sflag [#allocation3], %s296
        %s298 = sand.u32 %s33, 1
        %s299 = smul.addr %s298, 32
        %s300 = scalar_lea.vmem [#allocation2], %s299
        // Predicated region
        $region45: #{tpu_custom_call.1} parent=43 // pred_check
          %p301 = pneg %p46
        $region46: #{tpu_custom_call.1} parent=43 // pred_check_branch
          %303 = sbr.rel (%p301) target = $region48
        $region47: #{tpu_custom_call.1} parent=43 // pred_region
          %305 = dma.done %s297, 512
        $region48: #{tpu_custom_call.1} parent=43 // pred_fallthru
          _
        // Predicated region
        $region49: #{tpu_custom_call.1} parent=43 // pred_check
          %p306 = pneg %p67
        $region50: #{tpu_custom_call.1} parent=43 // pred_check_branch
          %308 = sbr.rel (%p306) target = $region52
        $region51: #{tpu_custom_call.1} parent=43 // pred_region
          %310 = dma.done [#allocation6], 4096
        $region52: #{tpu_custom_call.1} parent=43 // pred_fallthru
          _
        // Predicated region
        $region53: #{tpu_custom_call.1} parent=43 // pred_check
          %p311 = pneg %p88
        $region54: #{tpu_custom_call.1} parent=43 // pred_check_branch
          %313 = sbr.rel (%p311) target = $region56
        $region55: #{tpu_custom_call.1} parent=43 // pred_region
          %315 = dma.done [#allocation6], 32
        $region56: #{tpu_custom_call.1} parent=43 // pred_fallthru
          _
        // Predicated region
        $region57: #{tpu_custom_call.1} parent=43 // pred_check
          %p316 = pneg %p109
        $region58: #{tpu_custom_call.1} parent=43 // pred_check_branch
          %318 = sbr.rel (%p316) target = $region60
        $region59: #{tpu_custom_call.1} parent=43 // pred_region
          %320 = dma.done [#allocation9], 4096
        $region60: #{tpu_custom_call.1} parent=43 // pred_fallthru
          _
        %s321 = sand.u32 %s25, 1
        %s322 = scalar_lea.sflag [#allocation3], %s321
        %s323 = sand.u32 %s143, 1
        %s324 = smul.addr %s323, 32
        %s325 = scalar_lea.vmem [#allocation10], %s324
        // Predicated region
        $region61: #{tpu_custom_call.1} parent=43 // pred_check
          %p326 = pneg %p156
        $region62: #{tpu_custom_call.1} parent=43 // pred_check_branch
          %328 = sbr.rel (%p326) target = $region64
        $region63: #{tpu_custom_call.1} parent=43 // pred_region
          %330 = dma.done %s322, 512
        $region64: #{tpu_custom_call.1} parent=43 // pred_fallthru
          _
        %s331 = sand.u32 %s25, 1
        %s332 = scalar_lea.sflag [#allocation3], %s331
        %s333 = sand.u32 %s33, 1
        %s334 = smul.addr %s333, 32
        %s335 = scalar_lea.vmem [#allocation2], %s334
        %p336 = pneg %p46
        %p337 = pneg %p43
        %p338 = pneg %p67
        %p339 = pneg %p64
        %p340 = pneg %p88
        %p341 = pneg %p85
        %p342 = pneg %p109
        %p343 = pneg %p106
        %p344 = pneg %p130
        %p345 = pneg %p127
        %s346 = sand.u32 %s25, 1
        %s347 = scalar_lea.sflag [#allocation3], %s346
        %s348 = sand.u32 %s143, 1
        %s349 = smul.addr %s348, 32
        %s350 = scalar_lea.vmem [#allocation10], %s349
        %p351 = pneg %p156
        %p352 = pneg %p153
        %p353 = pneg %p182
        %p354 = pneg %p179
        %s355 = sand.u32 %s169, 1
        %s356 = scalar_lea.sflag [#allocation4], %s355
        %s357 = sand.u32 %s169, 1
        %s358 = smul.addr %s357, 96
        %s359 = scalar_lea.vmem [#allocation11], %s358
        %s360 = smul.u32 4, %s25
        %s361 = smul.u32 4, %s25
        %s362 = smul.u32 4, %s25
        %v363 = vld [vmem:[%s300] sm:$0xff]
        %v364 = vld [vmem:[%s300 + $0x8] sm:$0xff]
        %v365 = vld [vmem:[%s300 + $0x10] sm:$0xff]
        %v366 = vld [vmem:[%s300 + $0x18] sm:$0xff]
        %v367 = vld [vmem:[#allocation5] sm:$0xff]
        %v368 = vld [vmem:[#allocation5 + $0x8] sm:$0xff]
        %v369 = vld [vmem:[#allocation5 + $0x10] sm:$0xff]
        %v370 = vld [vmem:[#allocation5 + $0x18] sm:$0xff]
        %v371 = vld [vmem:[#allocation5 + $0x20] sm:$0xff]
        %v372 = vld [vmem:[#allocation5 + $0x28] sm:$0xff]
        %v373 = vld [vmem:[#allocation5 + $0x30] sm:$0xff]
        %v374 = vld [vmem:[#allocation5 + $0x38] sm:$0xff]
        %v375 = vld [vmem:[#allocation5 + $0x40] sm:$0xff]
        %v376 = vld [vmem:[#allocation5 + $0x48] sm:$0xff]
        %v377 = vld [vmem:[#allocation5 + $0x50] sm:$0xff]
        %v378 = vld [vmem:[#allocation5 + $0x58] sm:$0xff]
        %v379 = vld [vmem:[#allocation5 + $0x60] sm:$0xff]
        %v380 = vld [vmem:[#allocation5 + $0x68] sm:$0xff]
        %v381 = vld [vmem:[#allocation5 + $0x70] sm:$0xff]
        %v382 = vld [vmem:[#allocation5 + $0x78] sm:$0xff]
        %v383 = vld [vmem:[#allocation5 + $0x80] sm:$0xff]
        %v384 = vld [vmem:[#allocation5 + $0x88] sm:$0xff]
        %v385 = vld [vmem:[#allocation5 + $0x90] sm:$0xff]
        %v386 = vld [vmem:[#allocation5 + $0x98] sm:$0xff]
        %v387 = vld [vmem:[#allocation5 + $0xa0] sm:$0xff]
        %v388 = vld [vmem:[#allocation5 + $0xa8] sm:$0xff]
        %v389 = vld [vmem:[#allocation5 + $0xb0] sm:$0xff]
        %v390 = vld [vmem:[#allocation5 + $0xb8] sm:$0xff]
        %v391 = vld [vmem:[#allocation5 + $0xc0] sm:$0xff]
        %v392 = vld [vmem:[#allocation5 + $0xc8] sm:$0xff]
        %v393 = vld [vmem:[#allocation5 + $0xd0] sm:$0xff]
        %v394 = vld [vmem:[#allocation5 + $0xd8] sm:$0xff]
        %v395 = vld [vmem:[#allocation5 + $0xe0] sm:$0xff]
        %v396 = vld [vmem:[#allocation5 + $0xe8] sm:$0xff]
        %v397 = vld [vmem:[#allocation5 + $0xf0] sm:$0xff]
        %v398 = vld [vmem:[#allocation5 + $0xf8] sm:$0xff]
        %v399 = vld [vmem:[#allocation7] sm:$0x3]
        %v401 = vperm.slane %v399, 0
        %v402 = vperm.slane %v399, 1
        %v409 = vunpack.c.l.b16 %v363
        %v410 = vunpack.c.h.b16 %v363
        %v411 = vunpack.c.l.b16 %v364
        %v412 = vunpack.c.h.b16 %v364
        %v413 = vunpack.c.l.b16 %v365
        %v414 = vunpack.c.h.b16 %v365
        %v415 = vunpack.c.l.b16 %v366
        %v416 = vunpack.c.h.b16 %v366
        %v417 = vpack.c.b16 %v411, %v409
        %v418 = vpack.c.b16 %v412, %v410
        %v419 = vpack.c.b16 %v415, %v413
        %v420 = vpack.c.b16 %v416, %v414
        %v457 = vunpack.c.l.b16 %v367
        %v458 = vunpack.c.h.b16 %v367
        %v459 = vunpack.c.l.b16 %v368
        %v460 = vunpack.c.h.b16 %v368
        %v461 = vunpack.c.l.b16 %v369
        %v462 = vunpack.c.h.b16 %v369
        %v463 = vunpack.c.l.b16 %v370
        %v464 = vunpack.c.h.b16 %v370
        %v465 = vunpack.c.l.b16 %v371
        %v466 = vunpack.c.h.b16 %v371
        %v467 = vunpack.c.l.b16 %v372
        %v468 = vunpack.c.h.b16 %v372
        %v469 = vunpack.c.l.b16 %v373
        %v470 = vunpack.c.h.b16 %v373
        %v471 = vunpack.c.l.b16 %v374
        %v472 = vunpack.c.h.b16 %v374
        %v473 = vunpack.c.l.b16 %v375
        %v474 = vunpack.c.h.b16 %v375
        %v475 = vunpack.c.l.b16 %v376
        %v476 = vunpack.c.h.b16 %v376
        %v477 = vunpack.c.l.b16 %v377
        %v478 = vunpack.c.h.b16 %v377
        %v479 = vunpack.c.l.b16 %v378
        %v480 = vunpack.c.h.b16 %v378
        %v481 = vunpack.c.l.b16 %v379
        %v482 = vunpack.c.h.b16 %v379
        %v483 = vunpack.c.l.b16 %v380
        %v484 = vunpack.c.h.b16 %v380
        %v485 = vunpack.c.l.b16 %v381
        %v486 = vunpack.c.h.b16 %v381
        %v487 = vunpack.c.l.b16 %v382
        %v488 = vunpack.c.h.b16 %v382
        %v489 = vunpack.c.l.b16 %v383
        %v490 = vunpack.c.h.b16 %v383
        %v491 = vunpack.c.l.b16 %v384
        %v492 = vunpack.c.h.b16 %v384
        %v493 = vunpack.c.l.b16 %v385
        %v494 = vunpack.c.h.b16 %v385
        %v495 = vunpack.c.l.b16 %v386
        %v496 = vunpack.c.h.b16 %v386
        %v497 = vunpack.c.l.b16 %v387
        %v498 = vunpack.c.h.b16 %v387
        %v499 = vunpack.c.l.b16 %v388
        %v500 = vunpack.c.h.b16 %v388
        %v501 = vunpack.c.l.b16 %v389
        %v502 = vunpack.c.h.b16 %v389
        %v503 = vunpack.c.l.b16 %v390
        %v504 = vunpack.c.h.b16 %v390
        %v505 = vunpack.c.l.b16 %v391
        %v506 = vunpack.c.h.b16 %v391
        %v507 = vunpack.c.l.b16 %v392
        %v508 = vunpack.c.h.b16 %v392
        %v509 = vunpack.c.l.b16 %v393
        %v510 = vunpack.c.h.b16 %v393
        %v511 = vunpack.c.l.b16 %v394
        %v512 = vunpack.c.h.b16 %v394
        %v513 = vunpack.c.l.b16 %v395
        %v514 = vunpack.c.h.b16 %v395
        %v515 = vunpack.c.l.b16 %v396
        %v516 = vunpack.c.h.b16 %v396
        %v517 = vunpack.c.l.b16 %v397
        %v518 = vunpack.c.h.b16 %v397
        %v519 = vunpack.c.l.b16 %v398
        %v520 = vunpack.c.h.b16 %v398
        %v521 = vpack.c.b16 %v459, %v457
        %v522 = vpack.c.b16 %v460, %v458
        %v523 = vpack.c.b16 %v463, %v461
        %v524 = vpack.c.b16 %v464, %v462
        %v525 = vpack.c.b16 %v467, %v465
        %v526 = vpack.c.b16 %v468, %v466
        %v527 = vpack.c.b16 %v471, %v469
        %v528 = vpack.c.b16 %v472, %v470
        %v529 = vpack.c.b16 %v475, %v473
        %v530 = vpack.c.b16 %v476, %v474
        %v531 = vpack.c.b16 %v479, %v477
        %v532 = vpack.c.b16 %v480, %v478
        %v533 = vpack.c.b16 %v483, %v481
        %v534 = vpack.c.b16 %v484, %v482
        %v535 = vpack.c.b16 %v487, %v485
        %v536 = vpack.c.b16 %v488, %v486
        %v537 = vpack.c.b16 %v491, %v489
        %v538 = vpack.c.b16 %v492, %v490
        %v539 = vpack.c.b16 %v495, %v493
        %v540 = vpack.c.b16 %v496, %v494
        %v541 = vpack.c.b16 %v499, %v497
        %v542 = vpack.c.b16 %v500, %v498
        %v543 = vpack.c.b16 %v503, %v501
        %v544 = vpack.c.b16 %v504, %v502
        %v545 = vpack.c.b16 %v507, %v505
        %v546 = vpack.c.b16 %v508, %v506
        %v547 = vpack.c.b16 %v511, %v509
        %v548 = vpack.c.b16 %v512, %v510
        %v549 = vpack.c.b16 %v515, %v513
        %v550 = vpack.c.b16 %v516, %v514
        %v551 = vpack.c.b16 %v519, %v517
        %v552 = vpack.c.b16 %v520, %v518
        %585 = vmatpush.bf16.msra.mxu0 %v535
        %586 = vmatpush.bf16.msra.mxu0 %v533
        %587 = vmatpush.bf16.msra.mxu0 %v531
        %588 = vmatpush.bf16.msra.mxu0 %v529
        %589 = vmatpush.bf16.msra.mxu0 %v527
        %590 = vmatpush.bf16.msra.mxu0 %v525
        %591 = vmatpush.bf16.msra.mxu0 %v523
        %592 = vmatpush.bf16.msra.mxu0 %v521
        %593 = vmatmul.bf16.gmra.mxu0 %v417
        %v594 = vpop.f32.mrf.mxu0
        %v595 = vadd.f32 %v401, %v594
        %v596 = vpop.f32.mrf.mxu0
        %v597 = vadd.f32 %v401, %v596
        %598 = vmatmul.bf16.gmra.mxu0 %v419
        %v599 = vpop.f32.mrf.mxu0
        %v600 = vadd.f32 %v401, %v599
        %v601 = vpop.f32.mrf.mxu0
        %v602 = vadd.f32 %v401, %v601
        %603 = vdwg.mxu0
        %604 = vmatpush.bf16.msra.mxu0 %v551
        %605 = vmatpush.bf16.msra.mxu0 %v549
        %606 = vmatpush.bf16.msra.mxu0 %v547
        %607 = vmatpush.bf16.msra.mxu0 %v545
        %608 = vmatpush.bf16.msra.mxu0 %v543
        %609 = vmatpush.bf16.msra.mxu0 %v541
        %610 = vmatpush.bf16.msra.mxu0 %v539
        %611 = vmatpush.bf16.msra.mxu0 %v537
        %612 = vmatmul.bf16.gmra.mxu0 %v418
        %v613 = vpop.f32.mrf.mxu0
        %v614 = vadd.f32 %v595, %v613
        %v615 = vpop.f32.mrf.mxu0
        %v616 = vadd.f32 %v597, %v615
        %617 = vmatmul.bf16.gmra.mxu0 %v420
        %v618 = vpop.f32.mrf.mxu0
        %v619 = vadd.f32 %v600, %v618
        %v620 = vpop.f32.mrf.mxu0
        %v621 = vadd.f32 %v602, %v620
        %622 = vdwg.mxu0
        %623 = vmatpush.bf16.msra.mxu0 %v536
        %624 = vmatpush.bf16.msra.mxu0 %v534
        %625 = vmatpush.bf16.msra.mxu0 %v532
        %626 = vmatpush.bf16.msra.mxu0 %v530
        %627 = vmatpush.bf16.msra.mxu0 %v528
        %628 = vmatpush.bf16.msra.mxu0 %v526
        %629 = vmatpush.bf16.msra.mxu0 %v524
        %630 = vmatpush.bf16.msra.mxu0 %v522
        %631 = vmatmul.bf16.gmra.mxu0 %v417
        %v632 = vpop.f32.mrf.mxu0
        %v633 = vadd.f32 %v402, %v632
        %v634 = vpop.f32.mrf.mxu0
        %v635 = vadd.f32 %v402, %v634
        %636 = vmatmul.bf16.gmra.mxu0 %v419
        %v637 = vpop.f32.mrf.mxu0
        %v638 = vadd.f32 %v402, %v637
        %v639 = vpop.f32.mrf.mxu0
        %v640 = vadd.f32 %v402, %v639
        %641 = vdwg.mxu0
        %642 = vmatpush.bf16.msra.mxu0 %v552
        %643 = vmatpush.bf16.msra.mxu0 %v550
        %644 = vmatpush.bf16.msra.mxu0 %v548
        %645 = vmatpush.bf16.msra.mxu0 %v546
        %646 = vmatpush.bf16.msra.mxu0 %v544
        %647 = vmatpush.bf16.msra.mxu0 %v542
        %648 = vmatpush.bf16.msra.mxu0 %v540
        %649 = vmatpush.bf16.msra.mxu0 %v538
        %650 = vmatmul.bf16.gmra.mxu0 %v418
        %v651 = vpop.f32.mrf.mxu0
        %v652 = vadd.f32 %v633, %v651
        %v653 = vpop.f32.mrf.mxu0
        %v654 = vadd.f32 %v635, %v653
        %655 = vmatmul.bf16.gmra.mxu0 %v420
        %v656 = vpop.f32.mrf.mxu0
        %v657 = vadd.f32 %v638, %v656
        %v658 = vpop.f32.mrf.mxu0
        %v659 = vadd.f32 %v640, %v658
        %660 = vdwg.mxu0
        %v661 = vmax.f32 %v614, 0.0
        %v662 = vmax.f32 %v652, 0.0
        %v663 = vmax.f32 %v616, 0.0
        %v664 = vmax.f32 %v654, 0.0
        %v665 = vmax.f32 %v619, 0.0
        %v666 = vmax.f32 %v657, 0.0
        %v667 = vmax.f32 %v621, 0.0
        %v668 = vmax.f32 %v659, 0.0
        %v669 = vpack.c.bf16 %v663, %v661
        %v670 = vpack.c.bf16 %v664, %v662
        %v671 = vpack.c.bf16 %v667, %v665
        %v672 = vpack.c.bf16 %v668, %v666
        %v673 = vld [vmem:[#allocation8] sm:$0xff]
        %v674 = vld [vmem:[#allocation8 + $0x8] sm:$0xff]
        %v675 = vld [vmem:[#allocation8 + $0x10] sm:$0xff]
        %v676 = vld [vmem:[#allocation8 + $0x18] sm:$0xff]
        %v677 = vld [vmem:[#allocation8 + $0x20] sm:$0xff]
        %v678 = vld [vmem:[#allocation8 + $0x28] sm:$0xff]
        %v679 = vld [vmem:[#allocation8 + $0x30] sm:$0xff]
        %v680 = vld [vmem:[#allocation8 + $0x38] sm:$0xff]
        %v681 = vld [vmem:[#allocation8 + $0x40] sm:$0xff]
        %v682 = vld [vmem:[#allocation8 + $0x48] sm:$0xff]
        %v683 = vld [vmem:[#allocation8 + $0x50] sm:$0xff]
        %v684 = vld [vmem:[#allocation8 + $0x58] sm:$0xff]
        %v685 = vld [vmem:[#allocation8 + $0x60] sm:$0xff]
        %v686 = vld [vmem:[#allocation8 + $0x68] sm:$0xff]
        %v687 = vld [vmem:[#allocation8 + $0x70] sm:$0xff]
        %v688 = vld [vmem:[#allocation8 + $0x78] sm:$0xff]
        %v689 = vld [vmem:[#allocation8 + $0x80] sm:$0xff]
        %v690 = vld [vmem:[#allocation8 + $0x88] sm:$0xff]
        %v691 = vld [vmem:[#allocation8 + $0x90] sm:$0xff]
        %v692 = vld [vmem:[#allocation8 + $0x98] sm:$0xff]
        %v693 = vld [vmem:[#allocation8 + $0xa0] sm:$0xff]
        %v694 = vld [vmem:[#allocation8 + $0xa8] sm:$0xff]
        %v695 = vld [vmem:[#allocation8 + $0xb0] sm:$0xff]
        %v696 = vld [vmem:[#allocation8 + $0xb8] sm:$0xff]
        %v697 = vld [vmem:[#allocation8 + $0xc0] sm:$0xff]
        %v698 = vld [vmem:[#allocation8 + $0xc8] sm:$0xff]
        %v699 = vld [vmem:[#allocation8 + $0xd0] sm:$0xff]
        %v700 = vld [vmem:[#allocation8 + $0xd8] sm:$0xff]
        %v701 = vld [vmem:[#allocation8 + $0xe0] sm:$0xff]
        %v702 = vld [vmem:[#allocation8 + $0xe8] sm:$0xff]
        %v703 = vld [vmem:[#allocation8 + $0xf0] sm:$0xff]
        %v704 = vld [vmem:[#allocation8 + $0xf8] sm:$0xff]
        %v705 = vld [vmem:[%s4] sm:$0x3]
        %v707 = vperm.slane %v705, 0
        %v708 = vperm.slane %v705, 1
        %v743 = vunpack.c.l.b16 %v673
        %v744 = vunpack.c.h.b16 %v673
        %v745 = vunpack.c.l.b16 %v674
        %v746 = vunpack.c.h.b16 %v674
        %v747 = vunpack.c.l.b16 %v675
        %v748 = vunpack.c.h.b16 %v675
        %v749 = vunpack.c.l.b16 %v676
        %v750 = vunpack.c.h.b16 %v676
        %v751 = vunpack.c.l.b16 %v677
        %v752 = vunpack.c.h.b16 %v677
        %v753 = vunpack.c.l.b16 %v678
        %v754 = vunpack.c.h.b16 %v678
        %v755 = vunpack.c.l.b16 %v679
        %v756 = vunpack.c.h.b16 %v679
        %v757 = vunpack.c.l.b16 %v680
        %v758 = vunpack.c.h.b16 %v680
        %v759 = vunpack.c.l.b16 %v681
        %v760 = vunpack.c.h.b16 %v681
        %v761 = vunpack.c.l.b16 %v682
        %v762 = vunpack.c.h.b16 %v682
        %v763 = vunpack.c.l.b16 %v683
        %v764 = vunpack.c.h.b16 %v683
        %v765 = vunpack.c.l.b16 %v684
        %v766 = vunpack.c.h.b16 %v684
        %v767 = vunpack.c.l.b16 %v685
        %v768 = vunpack.c.h.b16 %v685
        %v769 = vunpack.c.l.b16 %v686
        %v770 = vunpack.c.h.b16 %v686
        %v771 = vunpack.c.l.b16 %v687
        %v772 = vunpack.c.h.b16 %v687
        %v773 = vunpack.c.l.b16 %v688
        %v774 = vunpack.c.h.b16 %v688
        %v775 = vunpack.c.l.b16 %v689
        %v776 = vunpack.c.h.b16 %v689
        %v777 = vunpack.c.l.b16 %v690
        %v778 = vunpack.c.h.b16 %v690
        %v779 = vunpack.c.l.b16 %v691
        %v780 = vunpack.c.h.b16 %v691
        %v781 = vunpack.c.l.b16 %v692
        %v782 = vunpack.c.h.b16 %v692
        %v783 = vunpack.c.l.b16 %v693
        %v784 = vunpack.c.h.b16 %v693
        %v785 = vunpack.c.l.b16 %v694
        %v786 = vunpack.c.h.b16 %v694
        %v787 = vunpack.c.l.b16 %v695
        %v788 = vunpack.c.h.b16 %v695
        %v789 = vunpack.c.l.b16 %v696
        %v790 = vunpack.c.h.b16 %v696
        %v791 = vunpack.c.l.b16 %v697
        %v792 = vunpack.c.h.b16 %v697
        %v793 = vunpack.c.l.b16 %v698
        %v794 = vunpack.c.h.b16 %v698
        %v795 = vunpack.c.l.b16 %v699
        %v796 = vunpack.c.h.b16 %v699
        %v797 = vunpack.c.l.b16 %v700
        %v798 = vunpack.c.h.b16 %v700
        %v799 = vunpack.c.l.b16 %v701
        %v800 = vunpack.c.h.b16 %v701
        %v801 = vunpack.c.l.b16 %v702
        %v802 = vunpack.c.h.b16 %v702
        %v803 = vunpack.c.l.b16 %v703
        %v804 = vunpack.c.h.b16 %v703
        %v805 = vunpack.c.l.b16 %v704
        %v806 = vunpack.c.h.b16 %v704
        %v807 = vpack.c.b16 %v745, %v743
        %v808 = vpack.c.b16 %v746, %v744
        %v809 = vpack.c.b16 %v749, %v747
        %v810 = vpack.c.b16 %v750, %v748
        %v811 = vpack.c.b16 %v753, %v751
        %v812 = vpack.c.b16 %v754, %v752
        %v813 = vpack.c.b16 %v757, %v755
        %v814 = vpack.c.b16 %v758, %v756
        %v815 = vpack.c.b16 %v761, %v759
        %v816 = vpack.c.b16 %v762, %v760
        %v817 = vpack.c.b16 %v765, %v763
        %v818 = vpack.c.b16 %v766, %v764
        %v819 = vpack.c.b16 %v769, %v767
        %v820 = vpack.c.b16 %v770, %v768
        %v821 = vpack.c.b16 %v773, %v771
        %v822 = vpack.c.b16 %v774, %v772
        %v823 = vpack.c.b16 %v777, %v775
        %v824 = vpack.c.b16 %v778, %v776
        %v825 = vpack.c.b16 %v781, %v779
        %v826 = vpack.c.b16 %v782, %v780
        %v827 = vpack.c.b16 %v785, %v783
        %v828 = vpack.c.b16 %v786, %v784
        %v829 = vpack.c.b16 %v789, %v787
        %v830 = vpack.c.b16 %v790, %v788
        %v831 = vpack.c.b16 %v793, %v791
        %v832 = vpack.c.b16 %v794, %v792
        %v833 = vpack.c.b16 %v797, %v795
        %v834 = vpack.c.b16 %v798, %v796
        %v835 = vpack.c.b16 %v801, %v799
        %v836 = vpack.c.b16 %v802, %v800
        %v837 = vpack.c.b16 %v805, %v803
        %v838 = vpack.c.b16 %v806, %v804
        %871 = vmatpush.bf16.msra.mxu0 %v821
        %872 = vmatpush.bf16.msra.mxu0 %v819
        %873 = vmatpush.bf16.msra.mxu0 %v817
        %874 = vmatpush.bf16.msra.mxu0 %v815
        %875 = vmatpush.bf16.msra.mxu0 %v813
        %876 = vmatpush.bf16.msra.mxu0 %v811
        %877 = vmatpush.bf16.msra.mxu0 %v809
        %878 = vmatpush.bf16.msra.mxu0 %v807
        %879 = vmatmul.bf16.gmra.mxu0 %v669
        %v880 = vpop.f32.mrf.mxu0
        %v881 = vadd.f32 %v707, %v880
        %v882 = vpop.f32.mrf.mxu0
        %v883 = vadd.f32 %v707, %v882
        %884 = vmatmul.bf16.gmra.mxu0 %v671
        %v885 = vpop.f32.mrf.mxu0
        %v886 = vadd.f32 %v707, %v885
        %v887 = vpop.f32.mrf.mxu0
        %v888 = vadd.f32 %v707, %v887
        %889 = vdwg.mxu0
        %890 = vmatpush.bf16.msra.mxu0 %v837
        %891 = vmatpush.bf16.msra.mxu0 %v835
        %892 = vmatpush.bf16.msra.mxu0 %v833
        %893 = vmatpush.bf16.msra.mxu0 %v831
        %894 = vmatpush.bf16.msra.mxu0 %v829
        %895 = vmatpush.bf16.msra.mxu0 %v827
        %896 = vmatpush.bf16.msra.mxu0 %v825
        %897 = vmatpush.bf16.msra.mxu0 %v823
        %898 = vmatmul.bf16.gmra.mxu0 %v670
        %v899 = vpop.f32.mrf.mxu0
        %v900 = vadd.f32 %v881, %v899
        %v901 = vpop.f32.mrf.mxu0
        %v902 = vadd.f32 %v883, %v901
        %903 = vmatmul.bf16.gmra.mxu0 %v672
        %v904 = vpop.f32.mrf.mxu0
        %v905 = vadd.f32 %v886, %v904
        %v906 = vpop.f32.mrf.mxu0
        %v907 = vadd.f32 %v888, %v906
        %908 = vdwg.mxu0
        %909 = vmatpush.bf16.msra.mxu0 %v822
        %910 = vmatpush.bf16.msra.mxu0 %v820
        %911 = vmatpush.bf16.msra.mxu0 %v818
        %912 = vmatpush.bf16.msra.mxu0 %v816
        %913 = vmatpush.bf16.msra.mxu0 %v814
        %914 = vmatpush.bf16.msra.mxu0 %v812
        %915 = vmatpush.bf16.msra.mxu0 %v810
        %916 = vmatpush.bf16.msra.mxu0 %v808
        %917 = vmatmul.bf16.gmra.mxu0 %v669
        %v918 = vpop.f32.mrf.mxu0
        %v919 = vadd.f32 %v708, %v918
        %v920 = vpop.f32.mrf.mxu0
        %v921 = vadd.f32 %v708, %v920
        %922 = vmatmul.bf16.gmra.mxu0 %v671
        %v923 = vpop.f32.mrf.mxu0
        %v924 = vadd.f32 %v708, %v923
        %v925 = vpop.f32.mrf.mxu0
        %v926 = vadd.f32 %v708, %v925
        %927 = vdwg.mxu0
        %928 = vmatpush.bf16.msra.mxu0 %v838
        %929 = vmatpush.bf16.msra.mxu0 %v836
        %930 = vmatpush.bf16.msra.mxu0 %v834
        %931 = vmatpush.bf16.msra.mxu0 %v832
        %932 = vmatpush.bf16.msra.mxu0 %v830
        %933 = vmatpush.bf16.msra.mxu0 %v828
        %934 = vmatpush.bf16.msra.mxu0 %v826
        %935 = vmatpush.bf16.msra.mxu0 %v824
        %936 = vmatmul.bf16.gmra.mxu0 %v670
        %v937 = vpop.f32.mrf.mxu0
        %v938 = vadd.f32 %v919, %v937
        %v939 = vpop.f32.mrf.mxu0
        %v940 = vadd.f32 %v921, %v939
        %941 = vmatmul.bf16.gmra.mxu0 %v672
        %v942 = vpop.f32.mrf.mxu0
        %v943 = vadd.f32 %v924, %v942
        %v944 = vpop.f32.mrf.mxu0
        %v945 = vadd.f32 %v926, %v944
        %946 = vdwg.mxu0
        %v947 = vmul.f32 %v938, 0.5
        %v948 = vmul.f32 %v940, 0.5
        %v949 = vmul.f32 %v943, 0.5
        %v950 = vmul.f32 %v945, 0.5
        %v951 = vmul.f32 %v947, 1.442695
        %v952 = vpow.pop %v951
        %v953 = vmul.f32 %v948, 1.442695
        %v954 = vpow.pop %v953
        %v955 = vmul.f32 %v949, 1.442695
        %v956 = vpow.pop %v955
        %v957 = vmul.f32 %v950, 1.442695
        %v958 = vpow.pop %v957
        %v959 = vld [vmem:[%s325] sm:$0xff]
        %v960 = vld [vmem:[%s325 + $0x8] sm:$0xff]
        %v961 = vld [vmem:[%s325 + $0x10] sm:$0xff]
        %v962 = vld [vmem:[%s325 + $0x18] sm:$0xff]
        %v963 = vmul.f32 %v952, %v959
        %v964 = vmul.f32 %v954, %v960
        %v965 = vmul.f32 %v956, %v961
        %v966 = vmul.f32 %v958, %v962
        %v967 = vadd.f32 %v900, %v963
        %v968 = vadd.f32 %v902, %v964
        %v969 = vadd.f32 %v905, %v965
        %v970 = vadd.f32 %v907, %v966
        %971 = vst [vmem:[%s359] sm:$0xff] %v900
        %972 = vst [vmem:[%s359 + $0x8] sm:$0xff] %v938
        %973 = vst [vmem:[%s359 + $0x18] sm:$0xff] %v902
        %974 = vst [vmem:[%s359 + $0x20] sm:$0xff] %v940
        %975 = vst [vmem:[%s359 + $0x30] sm:$0xff] %v905
        %976 = vst [vmem:[%s359 + $0x38] sm:$0xff] %v943
        %977 = vst [vmem:[%s359 + $0x48] sm:$0xff] %v907
        %978 = vst [vmem:[%s359 + $0x50] sm:$0xff] %v945
        %979 = vst [vmem:[%s359 + $0x10] sm:$0xff] %v967
        %980 = vst [vmem:[%s359 + $0x28] sm:$0xff] %v968
        %981 = vst [vmem:[%s359 + $0x40] sm:$0xff] %v969
        %982 = vst [vmem:[%s359 + $0x58] sm:$0xff] %v970
        %s983 = sand.u32 %s169, 1
        %s984 = scalar_lea.sflag [#allocation4], %s983
        %s985 = sand.u32 %s169, 1
        %s986 = smul.addr %s985, 96
        %s987 = scalar_lea.vmem [#allocation11], %s986
        // Predicated region
        $region65: #{tpu_custom_call.1} parent=43 // pred_check
          %p988 = pneg %p179
        $region66: #{tpu_custom_call.1} parent=43 // pred_check_branch
          %990 = sbr.rel (%p988) target = $region68
        $region67: #{tpu_custom_call.1} parent=43 // pred_region
          %s991 = smul.u32 4, %s25
          %993 = vsyncadd %s984, 0
          %s994 = smul.addr %s991, 3
          %s995 = smul.addr %s994, 8
          %s996 = scalar_lea.hbm %s6, %s995
          %s997 = sshll.u32 %s987, 4
          %s998 = int_to_ptr.vmem [resolvable:$true] %s997
          %s999 = sshll.u32 %s996, 4
          %s1000 = int_to_ptr.hbm [resolvable:$true] %s999
          %1005 = dma.vmem_to_hbm [thread:$0]  %s998, 1536, %s1000, %s984, 384, 384, 24
        $region68: #{tpu_custom_call.1} parent=43 // pred_fallthru
          _
      $region44: #{tpu_custom_call.1} parent=5 // pred_fallthru
        _
      %p1006 = scmp.le.s32.totalorder 2, %s20
      // Predicated region
      $region69: #{tpu_custom_call.1} parent=5 // pred_check
        %p1007 = pneg %p1006
      $region70: #{tpu_custom_call.1} parent=5 // pred_check_branch
        %1009 = sbr.rel (%p1007) target = $region72
      $region71: #{tpu_custom_call.1} parent=5 // pred_region
        %s1010 = ssub.s32 %s20, 2
        // Predicated region
        $region73: #{tpu_custom_call.1} parent=71 // pred_check
          %p1011 = pneg %p185
        $region74: #{tpu_custom_call.1} parent=71 // pred_check_branch
          %1013 = sbr.rel (%p1011) target = $region76
        $region75: #{tpu_custom_call.1} parent=71 // pred_region
          %s1014 = sand.u32 %s170, 1
          %s1015 = scalar_lea.sflag [#allocation4], %s1014
          %s1016 = sand.u32 %s170, 1
          %s1017 = smul.addr %s1016, 96
          %s1018 = scalar_lea.vmem [#allocation11], %s1017
          %1020 = dma.done %s1015, 1536
        $region76: #{tpu_custom_call.1} parent=71 // pred_fallthru
          _
      $region72: #{tpu_custom_call.1} parent=5 // pred_fallthru
        _
    $region6: #{tpu_custom_call.1} parent=1 // loop_footer
      %s24 = sadd.s32 1, %s20
    $region7: #{tpu_custom_call.1} parent=1 // loop_footer_branch
      %19 = sbr.rel target = $region3
    $region8: #{tpu_custom_call.1} parent=1 // loop_exit
      _
    %1021 = vsyncpa [#allocation3], 1
    %s1022 = scalar_lea.sflag [#allocation3], 1
    %1023 = vsyncpa %s1022, 1
    %1024 = vsyncpa [#allocation6], 1
    %1025 = vsyncpa [#allocation9], 1
    %1026 = vsyncpa [#allocation4], 1
    %s1027 = scalar_lea.sflag [#allocation4], 1
    %1028 = vsyncpa %s1027, 1

// kernel: tpu_custom_call.1
$region0: #{tpu_custom_call.1}
  #allocation0 [shape = 'u32[]', space=smem, size = 0x4, offset = 0x4, fixed_abs, tag = 'smem constant byte address 0x4 - core index']
  #allocation1 [shape = 'u32[72,128]{1,0:T(1,128)}', space=vmem, size = 0x9000, scoped, tag = 'internal scratch']
  %s0 = inlined_call_operand.hbm [shape: bf16[64,256], index: 0, kind: input, shape index: {}]
  %s1 = inlined_call_operand.hbm [shape: bf16[256,256], index: 1, kind: input, shape index: {}]
  %s2 = inlined_call_operand.hbm [shape: f32[1,256], index: 2, kind: input, shape index: {}]
  %s3 = inlined_call_operand.hbm [shape: bf16[256,256], index: 3, kind: input, shape index: {}]
  %s4 = inlined_call_operand.vmem [shape: f32[1,256], index: 4, kind: input, shape index: {}]
  %s5 = inlined_call_operand.hbm [shape: f32[64,128], index: 5, kind: input, shape index: {}]
  %s6 = inlined_call_operand.hbm [shape: f32[64,384], index: 6, kind: output, shape index: {}]
  %s7 = sld [smem:[#allocation0]]
  $region77: #{tpu_custom_call.1} parent=0
    _
  %s9 = ssub.s32 1, %s7
  %s10 = scalar_select 0, %s9, %s7
  $region1: #{tpu_custom_call.1} parent=0
    #allocation2 [shape = 'u8[32768]{0}', space=vmem, size = 0x8000, scoped, tag = 'input window, operand 0']
    #allocation3 [shape = 's32[2]{0}', space=sflag, size = 0x8, scoped, tag = 'scoped memory for tpu_custom_call.1']
    #allocation4 [shape = 's32[2]{0}', space=sflag, size = 0x8, scoped, tag = 'scoped memory for tpu_custom_call.1']
    #allocation5 [shape = 'u8[131072]{0}', space=vmem, size = 0x20000, scoped, tag = 'input window, operand 1, single buffered']
    #allocation6 [shape = 's32[1]{0}', space=sflag, size = 0x4, scoped, tag = 'scoped memory for tpu_custom_call.1']
    #allocation7 [shape = 'u8[1024]{0}', space=vmem, size = 0x400, scoped, tag = 'input window, operand 2, single buffered']
    #allocation8 [shape = 'u8[131072]{0}', space=vmem, size = 0x20000, scoped, tag = 'input window, operand 3, single buffered']
    #allocation9 [shape = 's32[1]{0}', space=sflag, size = 0x4, scoped, tag = 'scoped memory for tpu_custom_call.1']
    #allocation10 [shape = 'u8[32768]{0}', space=vmem, size = 0x8000, scoped, tag = 'input window, operand 5']
    #allocation11 [shape = 'u8[98304]{0}', space=vmem, size = 0x18000, scoped, tag = 'output window, operand 0']
    %11 = vsyncpa [#allocation3], 0
    %s12 = scalar_lea.sflag [#allocation3], 1
    %13 = vsyncpa %s12, 0
    %14 = vsyncpa [#allocation6], 0
    %15 = vsyncpa [#allocation9], 0
    %16 = vsyncpa [#allocation4], 0
    %s17 = scalar_lea.sflag [#allocation4], 1
    %18 = vsyncpa %s17, 0
    loop: start=0, step=1, limit=4
    $region2: #{tpu_custom_call.1} parent=1 // loop_pre_header
      _
    $region3: #{tpu_custom_call.1} parent=1 // loop_header
      %s20 = sphi 0, %s24
      %p21 = scmp.ge.s32.totalorder %s20, 4
      %s30 = sphi 0, %s32
      %s33 = sphi 0, %s30
      %s34 = sphi 0, %s33
      %s50 = sphi 0, %s34
      %s54 = sphi 0, %s54
      %s56 = sphi 0, %s54
      %s57 = sphi 0, %s56
      %s71 = sphi 0, %s57
      %s75 = sphi 0, %s75
      %s77 = sphi 0, %s75
      %s78 = sphi 0, %s77
      %s92 = sphi 0, %s78
      %s96 = sphi 0, %s96
      %s98 = sphi 0, %s96
      %s99 = sphi 0, %s98
      %s113 = sphi 0, %s99
      %s117 = sphi 0, %s117
      %s119 = sphi 0, %s117
      %s120 = sphi 0, %s119
      %s134 = sphi 0, %s120
      %s140 = sphi 0, %s142
      %s143 = sphi 0, %s140
      %s144 = sphi 0, %s143
      %s160 = sphi 0, %s144
      %s166 = sphi 0, %s168
      %s169 = sphi 0, %s166
      %s170 = sphi 0, %s169
      %s186 = sphi 0, %s170
    $region4: #{tpu_custom_call.1} parent=1 // loop_header_branch
      %23 = sbr.rel (%p21) target = $region8
    $region5: #{tpu_custom_call.1} parent=1 // loop_body
      %s25 = ssub.s32 %s20, 1
      %s26 = ssub.s32 %s20, 2
      %s27 = sadd.s32 %s20, 1
      %s28 = ssub.s32 %s20, %s27
      %p29 = scmp.eq.s32.totalorder %s28, 0
      %s31 = sadd.s32 %s30, 1
      %s32 = scalar_select %p29, %s30, %s31
      %p35 = pneg %p29
      %p36 = scmp.eq.s32.totalorder %s20, 1
      %p37 = por %p35, %p36
      %p38 = scmp.ne.s32.totalorder %s30, %s33
      %p39 = scmp.eq.s32.totalorder %s20, 0
      %p40 = por %p38, %p39
      %p41 = scmp.ne.s32.totalorder %s30, %s33
      %p42 = scmp.eq.s32.totalorder %s25, 1
      %p43 = por %p41, %p42
      %p44 = scmp.ne.s32.totalorder %s33, %s34
      %p45 = scmp.eq.s32.totalorder %s25, 0
      %p46 = por %p44, %p45
      %p47 = scmp.ne.s32.totalorder %s33, %s34
      %p48 = scmp.eq.s32.totalorder %s26, 1
      %p49 = por %p47, %p48
      %p51 = scmp.ne.s32.totalorder %s34, %s50
      %p52 = scmp.eq.s32.totalorder %s26, 0
      %p53 = por %p51, %p52
      %s55 = sadd.s32 %s54, 1
      %p58 = scmp.eq.s32.totalorder %s20, 1
      %p59 = scmp.ne.s32.totalorder %s54, %s56
      %p60 = scmp.eq.s32.totalorder %s20, 0
      %p61 = por %p59, %p60
      %p62 = scmp.ne.s32.totalorder %s54, %s56
      %p63 = scmp.eq.s32.totalorder %s25, 1
      %p64 = por %p62, %p63
      %p65 = scmp.ne.s32.totalorder %s56, %s57
      %p66 = scmp.eq.s32.totalorder %s25, 0
      %p67 = por %p65, %p66
      %p68 = scmp.ne.s32.totalorder %s56, %s57
      %p69 = scmp.eq.s32.totalorder %s26, 1
      %p70 = por %p68, %p69
      %p72 = scmp.ne.s32.totalorder %s57, %s71
      %p73 = scmp.eq.s32.totalorder %s26, 0
      %p74 = por %p72, %p73
      %s76 = sadd.s32 %s75, 1
      %p79 = scmp.eq.s32.totalorder %s20, 1
      %p80 = scmp.ne.s32.totalorder %s75, %s77
      %p81 = scmp.eq.s32.totalorder %s20, 0
      %p82 = por %p80, %p81
      %p83 = scmp.ne.s32.totalorder %s75, %s77
      %p84 = scmp.eq.s32.totalorder %s25, 1
      %p85 = por %p83, %p84
      %p86 = scmp.ne.s32.totalorder %s77, %s78
      %p87 = scmp.eq.s32.totalorder %s25, 0
      %p88 = por %p86, %p87
      %p89 = scmp.ne.s32.totalorder %s77, %s78
      %p90 = scmp.eq.s32.totalorder %s26, 1
      %p91 = por %p89, %p90
      %p93 = scmp.ne.s32.totalorder %s78, %s92
      %p94 = scmp.eq.s32.totalorder %s26, 0
      %p95 = por %p93, %p94
      %s97 = sadd.s32 %s96, 1
      %p100 = scmp.eq.s32.totalorder %s20, 1
      %p101 = scmp.ne.s32.totalorder %s96, %s98
      %p102 = scmp.eq.s32.totalorder %s20, 0
      %p103 = por %p101, %p102
      %p104 = scmp.ne.s32.totalorder %s96, %s98
      %p105 = scmp.eq.s32.totalorder %s25, 1
      %p106 = por %p104, %p105
      %p107 = scmp.ne.s32.totalorder %s98, %s99
      %p108 = scmp.eq.s32.totalorder %s25, 0
      %p109 = por %p107, %p108
      %p110 = scmp.ne.s32.totalorder %s98, %s99
      %p111 = scmp.eq.s32.totalorder %s26, 1
      %p112 = por %p110, %p111
      %p114 = scmp.ne.s32.totalorder %s99, %s113
      %p115 = scmp.eq.s32.totalorder %s26, 0
      %p116 = por %p114, %p115
      %s118 = sadd.s32 %s117, 1
      %p121 = scmp.eq.s32.totalorder %s20, 1
      %p122 = scmp.ne.s32.totalorder %s117, %s119
      %p123 = scmp.eq.s32.totalorder %s20, 0
      %p124 = por %p122, %p123
      %p125 = scmp.ne.s32.totalorder %s117, %s119
      %p126 = scmp.eq.s32.totalorder %s25, 1
      %p127 = por %p125, %p126
      %p128 = scmp.ne.s32.totalorder %s119, %s120
      %p129 = scmp.eq.s32.totalorder %s25, 0
      %p130 = por %p128, %p129
      %p131 = scmp.ne.s32.totalorder %s119, %s120
      %p132 = scmp.eq.s32.totalorder %s26, 1
      %p133 = por %p131, %p132
      %p135 = scmp.ne.s32.totalorder %s120, %s134
      %p136 = scmp.eq.s32.totalorder %s26, 0
      %p137 = por %p135, %p136
      %s138 = ssub.s32 %s20, %s27
      %p139 = scmp.eq.s32.totalorder %s138, 0
      %s141 = sadd.s32 %s140, 1
      %s142 = scalar_select %p139, %s140, %s141
      %p145 = pneg %p139
      %p146 = scmp.eq.s32.totalorder %s20, 1
      %p147 = por %p145, %p146
      %p148 = scmp.ne.s32.totalorder %s140, %s143
      %p149 = scmp.eq.s32.totalorder %s20, 0
      %p150 = por %p148, %p149
      %p151 = scmp.ne.s32.totalorder %s140, %s143
      %p152 = scmp.eq.s32.totalorder %s25, 1
      %p153 = por %p151, %p152
      %p154 = scmp.ne.s32.totalorder %s143, %s144
      %p155 = scmp.eq.s32.totalorder %s25, 0
      %p156 = por %p154, %p155
      %p157 = scmp.ne.s32.totalorder %s143, %s144
      %p158 = scmp.eq.s32.totalorder %s26, 1
      %p159 = por %p157, %p158
      %p161 = scmp.ne.s32.totalorder %s144, %s160
      %p162 = scmp.eq.s32.totalorder %s26, 0
      %p163 = por %p161, %p162
      %s164 = ssub.s32 %s20, %s27
      %p165 = scmp.eq.s32.totalorder %s164, 0
      %s167 = sadd.s32 %s166, 1
      %s168 = scalar_select %p165, %s166, %s167
      %p171 = pneg %p165
      %p172 = scmp.eq.s32.totalorder %s20, 1
      %p173 = por %p171, %p172
      %p174 = scmp.ne.s32.totalorder %s166, %s169
      %p175 = scmp.eq.s32.totalorder %s20, 0
      %p176 = por %p174, %p175
      %p177 = scmp.ne.s32.totalorder %s166, %s169
      %p178 = scmp.eq.s32.totalorder %s25, 1
      %p179 = por %p177, %p178
      %p180 = scmp.ne.s32.totalorder %s169, %s170
      %p181 = scmp.eq.s32.totalorder %s25, 0
      %p182 = por %p180, %p181
      %p183 = scmp.ne.s32.totalorder %s169, %s170
      %p184 = scmp.eq.s32.totalorder %s26, 1
      %p185 = por %p183, %p184
      %p187 = scmp.ne.s32.totalorder %s170, %s186
      %p188 = scmp.eq.s32.totalorder %s26, 0
      %p189 = por %p187, %p188
      %p190 = scmp.le.s32.totalorder 1, %s20
      %p191 = scmp.lt.s32.totalorder %s20, 3
      %p192 = pnand %p190, %p191
      %p193 = pneg %p192
      // Predicated region
      $region9: #{tpu_custom_call.1} parent=5 // pred_check
        _
      $region10: #{tpu_custom_call.1} parent=5 // pred_check_branch
        %195 = sbr.rel (%p192) target = $region12
      $region11: #{tpu_custom_call.1} parent=5 // pred_region
        %s196 = ssub.s32 %s20, 1
        // Predicated region
        $region13: #{tpu_custom_call.1} parent=11 // pred_check
          %p197 = pneg %p67
        $region14: #{tpu_custom_call.1} parent=11 // pred_check_branch
          %199 = sbr.rel (%p197) target = $region16
        $region15: #{tpu_custom_call.1} parent=11 // pred_region
          %201 = vsyncadd [#allocation6], 0
          %s202 = sshll.u32 %s1, 4
          %s203 = int_to_ptr.hbm [resolvable:$true] %s202
          %s204 = sshll.u32 [#allocation5], 4
          %s205 = int_to_ptr.vmem [resolvable:$true] %s204
          %210 = dma.hbm_to_vmem [thread:$0]  %s203, 4096, %s205, [#allocation6], 128, 128, 8
        $region16: #{tpu_custom_call.1} parent=11 // pred_fallthru
          _
        // Predicated region
        $region17: #{tpu_custom_call.1} parent=11 // pred_check
          %p211 = pneg %p88
        $region18: #{tpu_custom_call.1} parent=11 // pred_check_branch
          %213 = sbr.rel (%p211) target = $region20
        $region19: #{tpu_custom_call.1} parent=11 // pred_region
          %215 = vsyncadd [#allocation6], 0
          %s217 = sshll.u32 %s2, 4
          %s218 = int_to_ptr.hbm [resolvable:$true] %s217
          %s219 = sshll.u32 [#allocation7], 4
          %s220 = int_to_ptr.vmem [resolvable:$true] %s219
          %222 = dma.hbm_to_vmem [thread:$0]  %s218, 32, %s220, [#allocation6]
        $region20: #{tpu_custom_call.1} parent=11 // pred_fallthru
          _
        // Predicated region
        $region21: #{tpu_custom_call.1} parent=11 // pred_check
          %p223 = pneg %p109
        $region22: #{tpu_custom_call.1} parent=11 // pred_check_branch
          %225 = sbr.rel (%p223) target = $region24
        $region23: #{tpu_custom_call.1} parent=11 // pred_region
          %227 = vsyncadd [#allocation9], 0
          %s228 = sshll.u32 %s3, 4
          %s229 = int_to_ptr.hbm [resolvable:$true] %s228
          %s230 = sshll.u32 [#allocation8], 4
          %s231 = int_to_ptr.vmem [resolvable:$true] %s230
          %236 = dma.hbm_to_vmem [thread:$0]  %s229, 4096, %s231, [#allocation9], 128, 128, 8
        $region24: #{tpu_custom_call.1} parent=11 // pred_fallthru
          _
        // Predicated region
        $region25: #{tpu_custom_call.1} parent=11 // pred_check
          %p237 = pneg %p130
        $region26: #{tpu_custom_call.1} parent=11 // pred_check_branch
          %239 = sbr.rel (%p237) target = $region28
        $region27: #{tpu_custom_call.1} parent=11 // pred_region
          _
        $region28: #{tpu_custom_call.1} parent=11 // pred_fallthru
          _
      $region12: #{tpu_custom_call.1} parent=5 // pred_fallthru
        _
      %p240 = scmp.lt.s32.totalorder %s20, 2
      // Predicated region
      $region29: #{tpu_custom_call.1} parent=5 // pred_check
        %p241 = pneg %p240
      $region30: #{tpu_custom_call.1} parent=5 // pred_check_branch
        %243 = sbr.rel (%p241) target = $region32
      $region31: #{tpu_custom_call.1} parent=5 // pred_region
        // Predicated region
        $region33: #{tpu_custom_call.1} parent=31 // pred_check
          %p244 = pneg %p40
        $region34: #{tpu_custom_call.1} parent=31 // pred_check_branch
          %246 = sbr.rel (%p244) target = $region36
        $region35: #{tpu_custom_call.1} parent=31 // pred_region
          %s247 = sand.u32 %s20, 1
          %s248 = scalar_lea.sflag [#allocation3], %s247
          %s249 = sand.u32 %s30, 1
          %s250 = smul.addr %s249, 32
          %s251 = scalar_lea.vmem [#allocation2], %s250
          %s252 = smul.u32 4, %s20
          %254 = vsyncadd %s248, 0
          %s255 = smul.addr %s252, 2
          %s256 = smul.addr %s255, 4
          %s257 = scalar_lea.hbm %s0, %s256
          %s258 = sshll.u32 %s257, 4
          %s259 = int_to_ptr.hbm [resolvable:$true] %s258
          %s260 = sshll.u32 %s251, 4
          %s261 = int_to_ptr.vmem [resolvable:$true] %s260
          %266 = dma.hbm_to_vmem [thread:$0]  %s259, 512, %s261, %s248, 128, 128, 8
        $region36: #{tpu_custom_call.1} parent=31 // pred_fallthru
          _
        // Predicated region
        $region37: #{tpu_custom_call.1} parent=31 // pred_check
          %p267 = pneg %p150
        $region38: #{tpu_custom_call.1} parent=31 // pred_check_branch
          %269 = sbr.rel (%p267) target = $region40
        $region39: #{tpu_custom_call.1} parent=31 // pred_region
          %s270 = sand.u32 %s20, 1
          %s271 = scalar_lea.sflag [#allocation3], %s270
          %s272 = sand.u32 %s140, 1
          %s273 = smul.addr %s272, 32
          %s274 = scalar_lea.vmem [#allocation10], %s273
          %s275 = smul.u32 4, %s20
          %277 = vsyncadd %s271, 0
          %s278 = smul.addr %s275, 8
          %s279 = scalar_lea.hbm %s5, %s278
          %s280 = sshll.u32 %s279, 4
          %s281 = int_to_ptr.hbm [resolvable:$true] %s280
          %s282 = sshll.u32 %s274, 4
          %s283 = int_to_ptr.vmem [resolvable:$true] %s282
          %288 = dma.hbm_to_vmem [thread:$0]  %s281, 512, %s283, %s271, 128, 128, 8
        $region40: #{tpu_custom_call.1} parent=31 // pred_fallthru
          _
      $region32: #{tpu_custom_call.1} parent=5 // pred_fallthru
        _
      %p289 = scmp.le.s32.totalorder 1, %s20
      %p290 = scmp.lt.s32.totalorder %s20, 3
      %p291 = pnand %p289, %p290
      %p292 = pneg %p291
      // Predicated region
      $region41: #{tpu_custom_call.1} parent=5 // pred_check
        _
      $region42: #{tpu_custom_call.1} parent=5 // pred_check_branch
        %294 = sbr.rel (%p291) target = $region44
      $region43: #{tpu_custom_call.1} parent=5 // pred_region
        %s295 = ssub.s32 %s20, 1
        %s296 = sand.u32 %s25, 1
        %s297 = scalar_lea.sflag [#allocation3], %s296
        %s298 = sand.u32 %s33, 1
        %s299 = smul.addr %s298, 32
        %s300 = scalar_lea.vmem [#allocation2], %s299
        // Predicated region
        $region45: #{tpu_custom_call.1} parent=43 // pred_check
          %p301 = pneg %p46
        $region46: #{tpu_custom_call.1} parent=43 // pred_check_branch
          %303 = sbr.rel (%p301) target = $region48
        $region47: #{tpu_custom_call.1} parent=43 // pred_region
          %305 = dma.done %s297, 512
        $region48: #{tpu_custom_call.1} parent=43 // pred_fallthru
          _
        // Predicated region
        $region49: #{tpu_custom_call.1} parent=43 // pred_check
          %p306 = pneg %p67
        $region50: #{tpu_custom_call.1} parent=43 // pred_check_branch
          %308 = sbr.rel (%p306) target = $region52
        $region51: #{tpu_custom_call.1} parent=43 // pred_region
          %310 = dma.done [#allocation6], 4096
        $region52: #{tpu_custom_call.1} parent=43 // pred_fallthru
          _
        // Predicated region
        $region53: #{tpu_custom_call.1} parent=43 // pred_check
          %p311 = pneg %p88
        $region54: #{tpu_custom_call.1} parent=43 // pred_check_branch
          %313 = sbr.rel (%p311) target = $region56
        $region55: #{tpu_custom_call.1} parent=43 // pred_region
          %315 = dma.done [#allocation6], 32
        $region56: #{tpu_custom_call.1} parent=43 // pred_fallthru
          _
        // Predicated region
        $region57: #{tpu_custom_call.1} parent=43 // pred_check
          %p316 = pneg %p109
        $region58: #{tpu_custom_call.1} parent=43 // pred_check_branch
          %318 = sbr.rel (%p316) target = $region60
        $region59: #{tpu_custom_call.1} parent=43 // pred_region
          %320 = dma.done [#allocation9], 4096
        $region60: #{tpu_custom_call.1} parent=43 // pred_fallthru
          _
        %s321 = sand.u32 %s25, 1
        %s322 = scalar_lea.sflag [#allocation3], %s321
        %s323 = sand.u32 %s143, 1
        %s324 = smul.addr %s323, 32
        %s325 = scalar_lea.vmem [#allocation10], %s324
        // Predicated region
        $region61: #{tpu_custom_call.1} parent=43 // pred_check
          %p326 = pneg %p156
        $region62: #{tpu_custom_call.1} parent=43 // pred_check_branch
          %328 = sbr.rel (%p326) target = $region64
        $region63: #{tpu_custom_call.1} parent=43 // pred_region
          %330 = dma.done %s322, 512
        $region64: #{tpu_custom_call.1} parent=43 // pred_fallthru
          _
        %s331 = sand.u32 %s25, 1
        %s332 = scalar_lea.sflag [#allocation3], %s331
        %s333 = sand.u32 %s33, 1
        %s334 = smul.addr %s333, 32
        %s335 = scalar_lea.vmem [#allocation2], %s334
        %p336 = pneg %p46
        %p337 = pneg %p43
        %p338 = pneg %p67
        %p339 = pneg %p64
        %p340 = pneg %p88
        %p341 = pneg %p85
        %p342 = pneg %p109
        %p343 = pneg %p106
        %p344 = pneg %p130
        %p345 = pneg %p127
        %s346 = sand.u32 %s25, 1
        %s347 = scalar_lea.sflag [#allocation3], %s346
        %s348 = sand.u32 %s143, 1
        %s349 = smul.addr %s348, 32
        %s350 = scalar_lea.vmem [#allocation10], %s349
        %p351 = pneg %p156
        %p352 = pneg %p153
        %p353 = pneg %p182
        %p354 = pneg %p179
        %s355 = sand.u32 %s169, 1
        %s356 = scalar_lea.sflag [#allocation4], %s355
        %s357 = sand.u32 %s169, 1
        %s358 = smul.addr %s357, 96
        %s359 = scalar_lea.vmem [#allocation11], %s358
        %s360 = smul.u32 4, %s25
        %s361 = smul.u32 4, %s25
        %s362 = smul.u32 4, %s25
        %v363 = vld [vmem:[%s300] sm:$0xff]
        %v364 = vld [vmem:[%s300 + $0x8] sm:$0xff]
        %v365 = vld [vmem:[%s300 + $0x10] sm:$0xff]
        %v366 = vld [vmem:[%s300 + $0x18] sm:$0xff]
        %v367 = vld [vmem:[#allocation5] sm:$0xff]
        %v368 = vld [vmem:[#allocation5 + $0x8] sm:$0xff]
        %v369 = vld [vmem:[#allocation5 + $0x10] sm:$0xff]
        %v370 = vld [vmem:[#allocation5 + $0x18] sm:$0xff]
        %v371 = vld [vmem:[#allocation5 + $0x20] sm:$0xff]
        %v372 = vld [vmem:[#allocation5 + $0x28] sm:$0xff]
        %v373 = vld [vmem:[#allocation5 + $0x30] sm:$0xff]
        %v374 = vld [vmem:[#allocation5 + $0x38] sm:$0xff]
        %v375 = vld [vmem:[#allocation5 + $0x40] sm:$0xff]
        %v376 = vld [vmem:[#allocation5 + $0x48] sm:$0xff]
        %v377 = vld [vmem:[#allocation5 + $0x50] sm:$0xff]
        %v378 = vld [vmem:[#allocation5 + $0x58] sm:$0xff]
        %v379 = vld [vmem:[#allocation5 + $0x60] sm:$0xff]
        %v380 = vld [vmem:[#allocation5 + $0x68] sm:$0xff]
        %v381 = vld [vmem:[#allocation5 + $0x70] sm:$0xff]
        %v382 = vld [vmem:[#allocation5 + $0x78] sm:$0xff]
        %v383 = vld [vmem:[#allocation5 + $0x80] sm:$0xff]
        %v384 = vld [vmem:[#allocation5 + $0x88] sm:$0xff]
        %v385 = vld [vmem:[#allocation5 + $0x90] sm:$0xff]
        %v386 = vld [vmem:[#allocation5 + $0x98] sm:$0xff]
        %v387 = vld [vmem:[#allocation5 + $0xa0] sm:$0xff]
        %v388 = vld [vmem:[#allocation5 + $0xa8] sm:$0xff]
        %v389 = vld [vmem:[#allocation5 + $0xb0] sm:$0xff]
        %v390 = vld [vmem:[#allocation5 + $0xb8] sm:$0xff]
        %v391 = vld [vmem:[#allocation5 + $0xc0] sm:$0xff]
        %v392 = vld [vmem:[#allocation5 + $0xc8] sm:$0xff]
        %v393 = vld [vmem:[#allocation5 + $0xd0] sm:$0xff]
        %v394 = vld [vmem:[#allocation5 + $0xd8] sm:$0xff]
        %v395 = vld [vmem:[#allocation5 + $0xe0] sm:$0xff]
        %v396 = vld [vmem:[#allocation5 + $0xe8] sm:$0xff]
        %v397 = vld [vmem:[#allocation5 + $0xf0] sm:$0xff]
        %v398 = vld [vmem:[#allocation5 + $0xf8] sm:$0xff]
        %v399 = vld [vmem:[#allocation7] sm:$0x3]
        %v401 = vperm.slane %v399, 0
        %v402 = vperm.slane %v399, 1
        %v409 = vunpack.c.l.b16 %v363
        %v410 = vunpack.c.h.b16 %v363
        %v411 = vunpack.c.l.b16 %v364
        %v412 = vunpack.c.h.b16 %v364
        %v413 = vunpack.c.l.b16 %v365
        %v414 = vunpack.c.h.b16 %v365
        %v415 = vunpack.c.l.b16 %v366
        %v416 = vunpack.c.h.b16 %v366
        %v417 = vpack.c.b16 %v411, %v409
        %v418 = vpack.c.b16 %v412, %v410
        %v419 = vpack.c.b16 %v415, %v413
        %v420 = vpack.c.b16 %v416, %v414
        %v457 = vunpack.c.l.b16 %v367
        %v458 = vunpack.c.h.b16 %v367
        %v459 = vunpack.c.l.b16 %v368
        %v460 = vunpack.c.h.b16 %v368
        %v461 = vunpack.c.l.b16 %v369
        %v462 = vunpack.c.h.b16 %v369
        %v463 = vunpack.c.l.b16 %v370
        %v464 = vunpack.c.h.b16 %v370
        %v465 = vunpack.c.l.b16 %v371
        %v466 = vunpack.c.h.b16 %v371
        %v467 = vunpack.c.l.b16 %v372
        %v468 = vunpack.c.h.b16 %v372
        %v469 = vunpack.c.l.b16 %v373
        %v470 = vunpack.c.h.b16 %v373
        %v471 = vunpack.c.l.b16 %v374
        %v472 = vunpack.c.h.b16 %v374
        %v473 = vunpack.c.l.b16 %v375
        %v474 = vunpack.c.h.b16 %v375
        %v475 = vunpack.c.l.b16 %v376
        %v476 = vunpack.c.h.b16 %v376
        %v477 = vunpack.c.l.b16 %v377
        %v478 = vunpack.c.h.b16 %v377
        %v479 = vunpack.c.l.b16 %v378
        %v480 = vunpack.c.h.b16 %v378
        %v481 = vunpack.c.l.b16 %v379
        %v482 = vunpack.c.h.b16 %v379
        %v483 = vunpack.c.l.b16 %v380
        %v484 = vunpack.c.h.b16 %v380
        %v485 = vunpack.c.l.b16 %v381
        %v486 = vunpack.c.h.b16 %v381
        %v487 = vunpack.c.l.b16 %v382
        %v488 = vunpack.c.h.b16 %v382
        %v489 = vunpack.c.l.b16 %v383
        %v490 = vunpack.c.h.b16 %v383
        %v491 = vunpack.c.l.b16 %v384
        %v492 = vunpack.c.h.b16 %v384
        %v493 = vunpack.c.l.b16 %v385
        %v494 = vunpack.c.h.b16 %v385
        %v495 = vunpack.c.l.b16 %v386
        %v496 = vunpack.c.h.b16 %v386
        %v497 = vunpack.c.l.b16 %v387
        %v498 = vunpack.c.h.b16 %v387
        %v499 = vunpack.c.l.b16 %v388
        %v500 = vunpack.c.h.b16 %v388
        %v501 = vunpack.c.l.b16 %v389
        %v502 = vunpack.c.h.b16 %v389
        %v503 = vunpack.c.l.b16 %v390
        %v504 = vunpack.c.h.b16 %v390
        %v505 = vunpack.c.l.b16 %v391
        %v506 = vunpack.c.h.b16 %v391
        %v507 = vunpack.c.l.b16 %v392
        %v508 = vunpack.c.h.b16 %v392
        %v509 = vunpack.c.l.b16 %v393
        %v510 = vunpack.c.h.b16 %v393
        %v511 = vunpack.c.l.b16 %v394
        %v512 = vunpack.c.h.b16 %v394
        %v513 = vunpack.c.l.b16 %v395
        %v514 = vunpack.c.h.b16 %v395
        %v515 = vunpack.c.l.b16 %v396
        %v516 = vunpack.c.h.b16 %v396
        %v517 = vunpack.c.l.b16 %v397
        %v518 = vunpack.c.h.b16 %v397
        %v519 = vunpack.c.l.b16 %v398
        %v520 = vunpack.c.h.b16 %v398
        %v521 = vpack.c.b16 %v459, %v457
        %v522 = vpack.c.b16 %v460, %v458
        %v523 = vpack.c.b16 %v463, %v461
        %v524 = vpack.c.b16 %v464, %v462
        %v525 = vpack.c.b16 %v467, %v465
        %v526 = vpack.c.b16 %v468, %v466
        %v527 = vpack.c.b16 %v471, %v469
        %v528 = vpack.c.b16 %v472, %v470
        %v529 = vpack.c.b16 %v475, %v473
        %v530 = vpack.c.b16 %v476, %v474
        %v531 = vpack.c.b16 %v479, %v477
        %v532 = vpack.c.b16 %v480, %v478
        %v533 = vpack.c.b16 %v483, %v481
        %v534 = vpack.c.b16 %v484, %v482
        %v535 = vpack.c.b16 %v487, %v485
        %v536 = vpack.c.b16 %v488, %v486
        %v537 = vpack.c.b16 %v491, %v489
        %v538 = vpack.c.b16 %v492, %v490
        %v539 = vpack.c.b16 %v495, %v493
        %v540 = vpack.c.b16 %v496, %v494
        %v541 = vpack.c.b16 %v499, %v497
        %v542 = vpack.c.b16 %v500, %v498
        %v543 = vpack.c.b16 %v503, %v501
        %v544 = vpack.c.b16 %v504, %v502
        %v545 = vpack.c.b16 %v507, %v505
        %v546 = vpack.c.b16 %v508, %v506
        %v547 = vpack.c.b16 %v511, %v509
        %v548 = vpack.c.b16 %v512, %v510
        %v549 = vpack.c.b16 %v515, %v513
        %v550 = vpack.c.b16 %v516, %v514
        %v551 = vpack.c.b16 %v519, %v517
        %v552 = vpack.c.b16 %v520, %v518
        %585 = vmatpush.bf16.msra.mxu0 %v535
        %586 = vmatpush.bf16.msra.mxu0 %v533
        %587 = vmatpush.bf16.msra.mxu0 %v531
        %588 = vmatpush.bf16.msra.mxu0 %v529
        %589 = vmatpush.bf16.msra.mxu0 %v527
        %590 = vmatpush.bf16.msra.mxu0 %v525
        %591 = vmatpush.bf16.msra.mxu0 %v523
        %592 = vmatpush.bf16.msra.mxu0 %v521
        %593 = vmatmul.bf16.gmra.mxu0 %v417
        %v594 = vpop.f32.mrf.mxu0
        %v595 = vadd.f32 %v401, %v594
        %v596 = vpop.f32.mrf.mxu0
        %v597 = vadd.f32 %v401, %v596
        %598 = vmatmul.bf16.gmra.mxu0 %v419
        %v599 = vpop.f32.mrf.mxu0
        %v600 = vadd.f32 %v401, %v599
        %v601 = vpop.f32.mrf.mxu0
        %v602 = vadd.f32 %v401, %v601
        %603 = vdwg.mxu0
        %604 = vmatpush.bf16.msra.mxu0 %v551
        %605 = vmatpush.bf16.msra.mxu0 %v549
        %606 = vmatpush.bf16.msra.mxu0 %v547
        %607 = vmatpush.bf16.msra.mxu0 %v545
        %608 = vmatpush.bf16.msra.mxu0 %v543
        %609 = vmatpush.bf16.msra.mxu0 %v541
        %610 = vmatpush.bf16.msra.mxu0 %v539
        %611 = vmatpush.bf16.msra.mxu0 %v537
        %612 = vmatmul.bf16.gmra.mxu0 %v418
        %v613 = vpop.f32.mrf.mxu0
        %v614 = vadd.f32 %v595, %v613
        %v615 = vpop.f32.mrf.mxu0
        %v616 = vadd.f32 %v597, %v615
        %617 = vmatmul.bf16.gmra.mxu0 %v420
        %v618 = vpop.f32.mrf.mxu0
        %v619 = vadd.f32 %v600, %v618
        %v620 = vpop.f32.mrf.mxu0
        %v621 = vadd.f32 %v602, %v620
        %622 = vdwg.mxu0
        %623 = vmatpush.bf16.msra.mxu0 %v536
        %624 = vmatpush.bf16.msra.mxu0 %v534
        %625 = vmatpush.bf16.msra.mxu0 %v532
        %626 = vmatpush.bf16.msra.mxu0 %v530
        %627 = vmatpush.bf16.msra.mxu0 %v528
        %628 = vmatpush.bf16.msra.mxu0 %v526
        %629 = vmatpush.bf16.msra.mxu0 %v524
        %630 = vmatpush.bf16.msra.mxu0 %v522
        %631 = vmatmul.bf16.gmra.mxu0 %v417
        %v632 = vpop.f32.mrf.mxu0
        %v633 = vadd.f32 %v402, %v632
        %v634 = vpop.f32.mrf.mxu0
        %v635 = vadd.f32 %v402, %v634
        %636 = vmatmul.bf16.gmra.mxu0 %v419
        %v637 = vpop.f32.mrf.mxu0
        %v638 = vadd.f32 %v402, %v637
        %v639 = vpop.f32.mrf.mxu0
        %v640 = vadd.f32 %v402, %v639
        %641 = vdwg.mxu0
        %642 = vmatpush.bf16.msra.mxu0 %v552
        %643 = vmatpush.bf16.msra.mxu0 %v550
        %644 = vmatpush.bf16.msra.mxu0 %v548
        %645 = vmatpush.bf16.msra.mxu0 %v546
        %646 = vmatpush.bf16.msra.mxu0 %v544
        %647 = vmatpush.bf16.msra.mxu0 %v542
        %648 = vmatpush.bf16.msra.mxu0 %v540
        %649 = vmatpush.bf16.msra.mxu0 %v538
        %650 = vmatmul.bf16.gmra.mxu0 %v418
        %v651 = vpop.f32.mrf.mxu0
        %v652 = vadd.f32 %v633, %v651
        %v653 = vpop.f32.mrf.mxu0
        %v654 = vadd.f32 %v635, %v653
        %655 = vmatmul.bf16.gmra.mxu0 %v420
        %v656 = vpop.f32.mrf.mxu0
        %v657 = vadd.f32 %v638, %v656
        %v658 = vpop.f32.mrf.mxu0
        %v659 = vadd.f32 %v640, %v658
        %660 = vdwg.mxu0
        %v661 = vmax.f32 %v614, 0.0
        %v662 = vmax.f32 %v652, 0.0
        %v663 = vmax.f32 %v616, 0.0
        %v664 = vmax.f32 %v654, 0.0
        %v665 = vmax.f32 %v619, 0.0
        %v666 = vmax.f32 %v657, 0.0
        %v667 = vmax.f32 %v621, 0.0
        %v668 = vmax.f32 %v659, 0.0
        %v669 = vpack.c.bf16 %v663, %v661
        %v670 = vpack.c.bf16 %v664, %v662
        %v671 = vpack.c.bf16 %v667, %v665
        %v672 = vpack.c.bf16 %v668, %v666
        %v673 = vld [vmem:[#allocation8] sm:$0xff]
        %v674 = vld [vmem:[#allocation8 + $0x8] sm:$0xff]
        %v675 = vld [vmem:[#allocation8 + $0x10] sm:$0xff]
        %v676 = vld [vmem:[#allocation8 + $0x18] sm:$0xff]
        %v677 = vld [vmem:[#allocation8 + $0x20] sm:$0xff]
        %v678 = vld [vmem:[#allocation8 + $0x28] sm:$0xff]
        %v679 = vld [vmem:[#allocation8 + $0x30] sm:$0xff]
        %v680 = vld [vmem:[#allocation8 + $0x38] sm:$0xff]
        %v681 = vld [vmem:[#allocation8 + $0x40] sm:$0xff]
        %v682 = vld [vmem:[#allocation8 + $0x48] sm:$0xff]
        %v683 = vld [vmem:[#allocation8 + $0x50] sm:$0xff]
        %v684 = vld [vmem:[#allocation8 + $0x58] sm:$0xff]
        %v685 = vld [vmem:[#allocation8 + $0x60] sm:$0xff]
        %v686 = vld [vmem:[#allocation8 + $0x68] sm:$0xff]
        %v687 = vld [vmem:[#allocation8 + $0x70] sm:$0xff]
        %v688 = vld [vmem:[#allocation8 + $0x78] sm:$0xff]
        %v689 = vld [vmem:[#allocation8 + $0x80] sm:$0xff]
        %v690 = vld [vmem:[#allocation8 + $0x88] sm:$0xff]
        %v691 = vld [vmem:[#allocation8 + $0x90] sm:$0xff]
        %v692 = vld [vmem:[#allocation8 + $0x98] sm:$0xff]
        %v693 = vld [vmem:[#allocation8 + $0xa0] sm:$0xff]
        %v694 = vld [vmem:[#allocation8 + $0xa8] sm:$0xff]
        %v695 = vld [vmem:[#allocation8 + $0xb0] sm:$0xff]
        %v696 = vld [vmem:[#allocation8 + $0xb8] sm:$0xff]
        %v697 = vld [vmem:[#allocation8 + $0xc0] sm:$0xff]
        %v698 = vld [vmem:[#allocation8 + $0xc8] sm:$0xff]
        %v699 = vld [vmem:[#allocation8 + $0xd0] sm:$0xff]
        %v700 = vld [vmem:[#allocation8 + $0xd8] sm:$0xff]
        %v701 = vld [vmem:[#allocation8 + $0xe0] sm:$0xff]
        %v702 = vld [vmem:[#allocation8 + $0xe8] sm:$0xff]
        %v703 = vld [vmem:[#allocation8 + $0xf0] sm:$0xff]
        %v704 = vld [vmem:[#allocation8 + $0xf8] sm:$0xff]
        %v705 = vld [vmem:[%s4] sm:$0x3]
        %v707 = vperm.slane %v705, 0
        %v708 = vperm.slane %v705, 1
        %v743 = vunpack.c.l.b16 %v673
        %v744 = vunpack.c.h.b16 %v673
        %v745 = vunpack.c.l.b16 %v674
        %v746 = vunpack.c.h.b16 %v674
        %v747 = vunpack.c.l.b16 %v675
        %v748 = vunpack.c.h.b16 %v675
        %v749 = vunpack.c.l.b16 %v676
        %v750 = vunpack.c.h.b16 %v676
        %v751 = vunpack.c.l.b16 %v677
        %v752 = vunpack.c.h.b16 %v677
        %v753 = vunpack.c.l.b16 %v678
        %v754 = vunpack.c.h.b16 %v678
        %v755 = vunpack.c.l.b16 %v679
        %v756 = vunpack.c.h.b16 %v679
        %v757 = vunpack.c.l.b16 %v680
        %v758 = vunpack.c.h.b16 %v680
        %v759 = vunpack.c.l.b16 %v681
        %v760 = vunpack.c.h.b16 %v681
        %v761 = vunpack.c.l.b16 %v682
        %v762 = vunpack.c.h.b16 %v682
        %v763 = vunpack.c.l.b16 %v683
        %v764 = vunpack.c.h.b16 %v683
        %v765 = vunpack.c.l.b16 %v684
        %v766 = vunpack.c.h.b16 %v684
        %v767 = vunpack.c.l.b16 %v685
        %v768 = vunpack.c.h.b16 %v685
        %v769 = vunpack.c.l.b16 %v686
        %v770 = vunpack.c.h.b16 %v686
        %v771 = vunpack.c.l.b16 %v687
        %v772 = vunpack.c.h.b16 %v687
        %v773 = vunpack.c.l.b16 %v688
        %v774 = vunpack.c.h.b16 %v688
        %v775 = vunpack.c.l.b16 %v689
        %v776 = vunpack.c.h.b16 %v689
        %v777 = vunpack.c.l.b16 %v690
        %v778 = vunpack.c.h.b16 %v690
        %v779 = vunpack.c.l.b16 %v691
        %v780 = vunpack.c.h.b16 %v691
        %v781 = vunpack.c.l.b16 %v692
        %v782 = vunpack.c.h.b16 %v692
        %v783 = vunpack.c.l.b16 %v693
        %v784 = vunpack.c.h.b16 %v693
        %v785 = vunpack.c.l.b16 %v694
        %v786 = vunpack.c.h.b16 %v694
        %v787 = vunpack.c.l.b16 %v695
        %v788 = vunpack.c.h.b16 %v695
        %v789 = vunpack.c.l.b16 %v696
        %v790 = vunpack.c.h.b16 %v696
        %v791 = vunpack.c.l.b16 %v697
        %v792 = vunpack.c.h.b16 %v697
        %v793 = vunpack.c.l.b16 %v698
        %v794 = vunpack.c.h.b16 %v698
        %v795 = vunpack.c.l.b16 %v699
        %v796 = vunpack.c.h.b16 %v699
        %v797 = vunpack.c.l.b16 %v700
        %v798 = vunpack.c.h.b16 %v700
        %v799 = vunpack.c.l.b16 %v701
        %v800 = vunpack.c.h.b16 %v701
        %v801 = vunpack.c.l.b16 %v702
        %v802 = vunpack.c.h.b16 %v702
        %v803 = vunpack.c.l.b16 %v703
        %v804 = vunpack.c.h.b16 %v703
        %v805 = vunpack.c.l.b16 %v704
        %v806 = vunpack.c.h.b16 %v704
        %v807 = vpack.c.b16 %v745, %v743
        %v808 = vpack.c.b16 %v746, %v744
        %v809 = vpack.c.b16 %v749, %v747
        %v810 = vpack.c.b16 %v750, %v748
        %v811 = vpack.c.b16 %v753, %v751
        %v812 = vpack.c.b16 %v754, %v752
        %v813 = vpack.c.b16 %v757, %v755
        %v814 = vpack.c.b16 %v758, %v756
        %v815 = vpack.c.b16 %v761, %v759
        %v816 = vpack.c.b16 %v762, %v760
        %v817 = vpack.c.b16 %v765, %v763
        %v818 = vpack.c.b16 %v766, %v764
        %v819 = vpack.c.b16 %v769, %v767
        %v820 = vpack.c.b16 %v770, %v768
        %v821 = vpack.c.b16 %v773, %v771
        %v822 = vpack.c.b16 %v774, %v772
        %v823 = vpack.c.b16 %v777, %v775
        %v824 = vpack.c.b16 %v778, %v776
        %v825 = vpack.c.b16 %v781, %v779
        %v826 = vpack.c.b16 %v782, %v780
        %v827 = vpack.c.b16 %v785, %v783
        %v828 = vpack.c.b16 %v786, %v784
        %v829 = vpack.c.b16 %v789, %v787
        %v830 = vpack.c.b16 %v790, %v788
        %v831 = vpack.c.b16 %v793, %v791
        %v832 = vpack.c.b16 %v794, %v792
        %v833 = vpack.c.b16 %v797, %v795
        %v834 = vpack.c.b16 %v798, %v796
        %v835 = vpack.c.b16 %v801, %v799
        %v836 = vpack.c.b16 %v802, %v800
        %v837 = vpack.c.b16 %v805, %v803
        %v838 = vpack.c.b16 %v806, %v804
        %871 = vmatpush.bf16.msra.mxu0 %v821
        %872 = vmatpush.bf16.msra.mxu0 %v819
        %873 = vmatpush.bf16.msra.mxu0 %v817
        %874 = vmatpush.bf16.msra.mxu0 %v815
        %875 = vmatpush.bf16.msra.mxu0 %v813
        %876 = vmatpush.bf16.msra.mxu0 %v811
        %877 = vmatpush.bf16.msra.mxu0 %v809
        %878 = vmatpush.bf16.msra.mxu0 %v807
        %879 = vmatmul.bf16.gmra.mxu0 %v669
        %v880 = vpop.f32.mrf.mxu0
        %v881 = vadd.f32 %v707, %v880
        %v882 = vpop.f32.mrf.mxu0
        %v883 = vadd.f32 %v707, %v882
        %884 = vmatmul.bf16.gmra.mxu0 %v671
        %v885 = vpop.f32.mrf.mxu0
        %v886 = vadd.f32 %v707, %v885
        %v887 = vpop.f32.mrf.mxu0
        %v888 = vadd.f32 %v707, %v887
        %889 = vdwg.mxu0
        %890 = vmatpush.bf16.msra.mxu0 %v837
        %891 = vmatpush.bf16.msra.mxu0 %v835
        %892 = vmatpush.bf16.msra.mxu0 %v833
        %893 = vmatpush.bf16.msra.mxu0 %v831
        %894 = vmatpush.bf16.msra.mxu0 %v829
        %895 = vmatpush.bf16.msra.mxu0 %v827
        %896 = vmatpush.bf16.msra.mxu0 %v825
        %897 = vmatpush.bf16.msra.mxu0 %v823
        %898 = vmatmul.bf16.gmra.mxu0 %v670
        %v899 = vpop.f32.mrf.mxu0
        %v900 = vadd.f32 %v881, %v899
        %v901 = vpop.f32.mrf.mxu0
        %v902 = vadd.f32 %v883, %v901
        %903 = vmatmul.bf16.gmra.mxu0 %v672
        %v904 = vpop.f32.mrf.mxu0
        %v905 = vadd.f32 %v886, %v904
        %v906 = vpop.f32.mrf.mxu0
        %v907 = vadd.f32 %v888, %v906
        %908 = vdwg.mxu0
        %909 = vmatpush.bf16.msra.mxu0 %v822
        %910 = vmatpush.bf16.msra.mxu0 %v820
        %911 = vmatpush.bf16.msra.mxu0 %v818
        %912 = vmatpush.bf16.msra.mxu0 %v816
        %913 = vmatpush.bf16.msra.mxu0 %v814
        %914 = vmatpush.bf16.msra.mxu0 %v812
        %915 = vmatpush.bf16.msra.mxu0 %v810
        %916 = vmatpush.bf16.msra.mxu0 %v808
        %917 = vmatmul.bf16.gmra.mxu0 %v669
        %v918 = vpop.f32.mrf.mxu0
        %v919 = vadd.f32 %v708, %v918
        %v920 = vpop.f32.mrf.mxu0
        %v921 = vadd.f32 %v708, %v920
        %922 = vmatmul.bf16.gmra.mxu0 %v671
        %v923 = vpop.f32.mrf.mxu0
        %v924 = vadd.f32 %v708, %v923
        %v925 = vpop.f32.mrf.mxu0
        %v926 = vadd.f32 %v708, %v925
        %927 = vdwg.mxu0
        %928 = vmatpush.bf16.msra.mxu0 %v838
        %929 = vmatpush.bf16.msra.mxu0 %v836
        %930 = vmatpush.bf16.msra.mxu0 %v834
        %931 = vmatpush.bf16.msra.mxu0 %v832
        %932 = vmatpush.bf16.msra.mxu0 %v830
        %933 = vmatpush.bf16.msra.mxu0 %v828
        %934 = vmatpush.bf16.msra.mxu0 %v826
        %935 = vmatpush.bf16.msra.mxu0 %v824
        %936 = vmatmul.bf16.gmra.mxu0 %v670
        %v937 = vpop.f32.mrf.mxu0
        %v938 = vadd.f32 %v919, %v937
        %v939 = vpop.f32.mrf.mxu0
        %v940 = vadd.f32 %v921, %v939
        %941 = vmatmul.bf16.gmra.mxu0 %v672
        %v942 = vpop.f32.mrf.mxu0
        %v943 = vadd.f32 %v924, %v942
        %v944 = vpop.f32.mrf.mxu0
        %v945 = vadd.f32 %v926, %v944
        %946 = vdwg.mxu0
        %v947 = vmul.f32 %v938, 0.5
        %v948 = vmul.f32 %v940, 0.5
        %v949 = vmul.f32 %v943, 0.5
        %v950 = vmul.f32 %v945, 0.5
        %v951 = vmul.f32 %v947, 1.442695
        %v952 = vpow.pop %v951
        %v953 = vmul.f32 %v948, 1.442695
        %v954 = vpow.pop %v953
        %v955 = vmul.f32 %v949, 1.442695
        %v956 = vpow.pop %v955
        %v957 = vmul.f32 %v950, 1.442695
        %v958 = vpow.pop %v957
        %v959 = vld [vmem:[%s325] sm:$0xff]
        %v960 = vld [vmem:[%s325 + $0x8] sm:$0xff]
        %v961 = vld [vmem:[%s325 + $0x10] sm:$0xff]
        %v962 = vld [vmem:[%s325 + $0x18] sm:$0xff]
        %v963 = vmul.f32 %v952, %v959
        %v964 = vmul.f32 %v954, %v960
        %v965 = vmul.f32 %v956, %v961
        %v966 = vmul.f32 %v958, %v962
        %v967 = vadd.f32 %v900, %v963
        %v968 = vadd.f32 %v902, %v964
        %v969 = vadd.f32 %v905, %v965
        %v970 = vadd.f32 %v907, %v966
        %971 = vst [vmem:[%s359] sm:$0xff] %v900
        %972 = vst [vmem:[%s359 + $0x8] sm:$0xff] %v938
        %973 = vst [vmem:[%s359 + $0x18] sm:$0xff] %v902
        %974 = vst [vmem:[%s359 + $0x20] sm:$0xff] %v940
        %975 = vst [vmem:[%s359 + $0x30] sm:$0xff] %v905
        %976 = vst [vmem:[%s359 + $0x38] sm:$0xff] %v943
        %977 = vst [vmem:[%s359 + $0x48] sm:$0xff] %v907
        %978 = vst [vmem:[%s359 + $0x50] sm:$0xff] %v945
        %979 = vst [vmem:[%s359 + $0x10] sm:$0xff] %v967
        %980 = vst [vmem:[%s359 + $0x28] sm:$0xff] %v968
        %981 = vst [vmem:[%s359 + $0x40] sm:$0xff] %v969
        %982 = vst [vmem:[%s359 + $0x58] sm:$0xff] %v970
        %s983 = sand.u32 %s169, 1
        %s984 = scalar_lea.sflag [#allocation4], %s983
        %s985 = sand.u32 %s169, 1
        %s986 = smul.addr %s985, 96
        %s987 = scalar_lea.vmem [#allocation11], %s986
        // Predicated region
        $region65: #{tpu_custom_call.1} parent=43 // pred_check
          %p988 = pneg %p179
        $region66: #{tpu_custom_call.1} parent=43 // pred_check_branch
          %990 = sbr.rel (%p988) target = $region68
        $region67: #{tpu_custom_call.1} parent=43 // pred_region
          %s991 = smul.u32 4, %s25
          %993 = vsyncadd %s984, 0
          %s994 = smul.addr %s991, 3
          %s995 = smul.addr %s994, 8
          %s996 = scalar_lea.hbm %s6, %s995
          %s997 = sshll.u32 %s987, 4
          %s998 = int_to_ptr.vmem [resolvable:$true] %s997
          %s999 = sshll.u32 %s996, 4
          %s1000 = int_to_ptr.hbm [resolvable:$true] %s999
          %1005 = dma.vmem_to_hbm [thread:$0]  %s998, 1536, %s1000, %s984, 384, 384, 24
        $region68: #{tpu_custom_call.1} parent=43 // pred_fallthru
          _
      $region44: #{tpu_custom_call.1} parent=5 // pred_fallthru
        _
      %p1006 = scmp.le.s32.totalorder 2, %s20
      // Predicated region
      $region69: #{tpu_custom_call.1} parent=5 // pred_check
        %p1007 = pneg %p1006
      $region70: #{tpu_custom_call.1} parent=5 // pred_check_branch
        %1009 = sbr.rel (%p1007) target = $region72
      $region71: #{tpu_custom_call.1} parent=5 // pred_region
        %s1010 = ssub.s32 %s20, 2
        // Predicated region
        $region73: #{tpu_custom_call.1} parent=71 // pred_check
          %p1011 = pneg %p185
        $region74: #{tpu_custom_call.1} parent=71 // pred_check_branch
          %1013 = sbr.rel (%p1011) target = $region76
        $region75: #{tpu_custom_call.1} parent=71 // pred_region
          %s1014 = sand.u32 %s170, 1
          %s1015 = scalar_lea.sflag [#allocation4], %s1014
          %s1016 = sand.u32 %s170, 1
          %s1017 = smul.addr %s1016, 96
          %s1018 = scalar_lea.vmem [#allocation11], %s1017
          %1020 = dma.done %s1015, 1536
        $region76: #{tpu_custom_call.1} parent=71 // pred_fallthru
          _
      $region72: #{tpu_custom_call.1} parent=5 // pred_fallthru
        _
    $region6: #{tpu_custom_call.1} parent=1 // loop_footer
      %s24 = sadd.s32 1, %s20
    $region7: #{tpu_custom_call.1} parent=1 // loop_footer_branch
      %19 = sbr.rel target = $region3
    $region8: #{tpu_custom_call.1} parent=1 // loop_exit
      _
    %1021 = vsyncpa [#allocation3], 1
    %s1022 = scalar_lea.sflag [#allocation3], 1
    %1023 = vsyncpa %s1022, 1
    %1024 = vsyncpa [#allocation6], 1
    %1025 = vsyncpa [#allocation9], 1
    %1026 = vsyncpa [#allocation4], 1
    %s1027 = scalar_lea.sflag [#allocation4], 1
    %1028 = vsyncpa %s1027, 1

</llo_original>
